<compile_context>
chip_gen: v7x
topology: tpu7x:2x2x1
jax: 0.10.0
libtpu: 0.0.40
codegen_flags: <defaults>
</compile_context>

<pallas_src>
import math

import jax
import jax.numpy as jnp
from jax import lax
from jax.experimental import pallas as pl
from jax.experimental.pallas import tpu as pltpu

# ------------------------- small DistilBERT config -------------------------
VOCAB = 64
MAX_POS = 16
HIDDEN = 32
N_HEADS = 4
HEAD_DIM = HIDDEN // N_HEADS
FFN_DIM = 4 * HIDDEN
N_LAYERS = 2
NUM_LABELS = 5
LN_EPS = 1e-12   # DistilBERT LayerNorm eps
NEG_INF = -1e9
LANE = 128       # lane width of the packed vector slab / padded classifier

# f32 vector-slab row layout
ROW_EMB_G = 0
ROW_EMB_B = 1
ROW_LAYER0 = 2
ROWS_PER_LAYER = 8           # bqkv, bo, ln1_g, ln1_b, b1, b2, ln2_g, ln2_b
ROW_FCB = ROW_LAYER0 + N_LAYERS * ROWS_PER_LAYER
N_VEC_ROWS = ((ROW_FCB + 1 + 7) // 8) * 8

assert FFN_DIM <= LANE and NUM_LABELS <= LANE and 3 * HIDDEN <= LANE


def _full_spec(shape):
    """Whole-array VMEM block for a grid of (1,)."""
    zeros = (0,) * len(shape)
    return pl.BlockSpec(shape, lambda i, _z=zeros: _z)


# ------------------------------ parameters ----------------------------------
def init_params(key):
    def normal(k, shape, scale=0.02):
        return scale * jax.random.normal(k, shape, dtype=jnp.float32)

    keys = jax.random.split(key, 3 + N_LAYERS)
    params = {
        "word_emb": normal(keys[0], (VOCAB, HIDDEN)),
        "pos_emb": normal(keys[1], (MAX_POS, HIDDEN)),
        "emb_ln_g": jnp.ones((HIDDEN,), jnp.float32),
        "emb_ln_b": jnp.zeros((HIDDEN,), jnp.float32),
        "fc_w": normal(keys[2], (HIDDEN, NUM_LABELS)),
        "fc_b": jnp.zeros((NUM_LABELS,), jnp.float32),
        "layers": [],
    }
    for l in range(N_LAYERS):
        lk = jax.random.split(keys[3 + l], 6)
        params["layers"].append({
            "wq": normal(lk[0], (HIDDEN, HIDDEN)), "bq": jnp.zeros((HIDDEN,), jnp.float32),
            "wk": normal(lk[1], (HIDDEN, HIDDEN)), "bk": jnp.zeros((HIDDEN,), jnp.float32),
            "wv": normal(lk[2], (HIDDEN, HIDDEN)), "bv": jnp.zeros((HIDDEN,), jnp.float32),
            "wo": normal(lk[3], (HIDDEN, HIDDEN)), "bo": jnp.zeros((HIDDEN,), jnp.float32),
            "ln1_g": jnp.ones((HIDDEN,), jnp.float32),
            "ln1_b": jnp.zeros((HIDDEN,), jnp.float32),
            "w1": normal(lk[4], (HIDDEN, FFN_DIM)), "b1": jnp.zeros((FFN_DIM,), jnp.float32),
            "w2": normal(lk[5], (FFN_DIM, HIDDEN)), "b2": jnp.zeros((HIDDEN,), jnp.float32),
            "ln2_g": jnp.ones((HIDDEN,), jnp.float32),
            "ln2_b": jnp.zeros((HIDDEN,), jnp.float32),
        })
    return params


def pack_params(params):
    """Stack per-layer matmul weights (bf16, QKV fused, 1/sqrt(d) folded),
    pack all small f32 vectors into one lane-dense (N_VEC_ROWS, 128) slab,
    and zero-pad the classifier to 128 lanes (bias padded with NEG_INF)."""
    bf16 = jnp.bfloat16
    scale = 1.0 / math.sqrt(HEAD_DIM)
    L = params["layers"]

    def vrow(vec, fill=0.0):
        r = jnp.full((LANE,), fill, jnp.float32)
        return r.at[: vec.shape[0]].set(vec.astype(jnp.float32))

    rows = [vrow(params["emb_ln_g"]), vrow(params["emb_ln_b"])]
    for l in L:
        rows.append(vrow(jnp.concatenate([l["bq"] * scale, l["bk"], l["bv"]], axis=0)))
        rows.append(vrow(l["bo"]))
        rows.append(vrow(l["ln1_g"]))
        rows.append(vrow(l["ln1_b"]))
        rows.append(vrow(l["b1"]))
        rows.append(vrow(l["b2"]))
        rows.append(vrow(l["ln2_g"]))
        rows.append(vrow(l["ln2_b"]))
    rows.append(vrow(params["fc_b"], fill=NEG_INF))   # pad lanes >= NUM_LABELS with -1e9
    while len(rows) < N_VEC_ROWS:
        rows.append(jnp.zeros((LANE,), jnp.float32))
    vecs = jnp.stack(rows, axis=0)                    # (N_VEC_ROWS, 128) f32

    def stack(fn):
        return jnp.stack([fn(l) for l in L], axis=0)

    fc_w = jnp.zeros((HIDDEN, LANE), jnp.float32).at[:, :NUM_LABELS].set(params["fc_w"])

    return {
        "word_emb": params["word_emb"].astype(bf16),                                   # (V, H)
        "pos_emb": params["pos_emb"],                                                  # (MAX_POS, H) f32
        "wqkv": stack(lambda l: jnp.concatenate(
            [l["wq"] * scale, l["wk"], l["wv"]], axis=1)).astype(bf16),                # (L, H, 3H)
        "wo": stack(lambda l: l["wo"]).astype(bf16),                                   # (L, H, H)
        "w1": stack(lambda l: l["w1"]).astype(bf16),                                   # (L, H, F)
        "w2": stack(lambda l: l["w2"]).astype(bf16),                                   # (L, F, H)
        "fc_w": fc_w.astype(bf16),                                                     # (H, 128)
        "vecs": vecs,                                                                  # (24, 128)
    }


# ------------------------------ fused kernel --------------------------------
def _make_kernel(B, S):
    BS = B * S

    def kernel(ids_ref, bias_ref, wemb_ref, pemb_ref, wqkv_ref, wo_ref,
               w1_ref, w2_ref, fcw_ref, vecs_ref, out_ref):
        f32 = jnp.float32
        bf16 = jnp.bfloat16

        def vrow(r, w):
            # static slice of the packed f32 vector slab -> (1, w)
            return vecs_ref[r:r + 1, 0:w]

        def layer_norm(x, gamma, beta):
            mean = jnp.mean(x, axis=-1, keepdims=True)
            var = jnp.mean(jnp.square(x - mean), axis=-1, keepdims=True)
            return (x - mean) * lax.rsqrt(var + LN_EPS) * gamma + beta

        def mm(x, w, bias):
            # bf16 MXU operands, f32 accumulation, f32 bias add.
            return jnp.dot(x.astype(bf16), w, preferred_element_type=f32) + bias

        def gelu(x):
            # exact (erf-based) GELU as in HF DistilBERT (tanh approx optional)
            return 0.5 * x * (1.0 + lax.erf(x * (1.0 / math.sqrt(2.0))))

        # ---- embeddings: token one-hot matmul + broadcast position rows ----
        tok = ids_ref[...]                                            # (BS, 1) int32
        vocab_iota = lax.broadcasted_iota(jnp.int32, (BS, VOCAB), 1)
        onehot = (tok == vocab_iota).astype(bf16)
        h = jnp.dot(onehot, wemb_ref[...], preferred_element_type=f32)  # (BS, H)
        h = h + jnp.tile(pemb_ref[0:S, :], (B, 1))                    # positions = arange(S)
        h = layer_norm(h, vrow(ROW_EMB_G, HIDDEN), vrow(ROW_EMB_B, HIDDEN))

        # precomputed block-diagonal (same-batch) + key-mask additive bias
        attn_bias = bias_ref[...]                                     # (BS, BS) f32

        # constant per-head lane masks, built once and reused for all layers
        col = lax.broadcasted_iota(jnp.int32, (1, HIDDEN), 1)
        head_masks = [
            ((col >= hh * HEAD_DIM) & (col < (hh + 1) * HEAD_DIM)).astype(f32)
            for hh in range(N_HEADS)
        ]

        # ----------------------- encoder layers ---------------------------
        for l in range(N_LAYERS):
            base = ROW_LAYER0 + l * ROWS_PER_LAYER
            x = h                                                     # (BS, H) f32

            # fused Q/K/V projection (1/sqrt(head_dim) folded into wq/bq)
            qkv = mm(x, wqkv_ref[l], vrow(base + 0, 3 * HIDDEN))      # (BS, 3H)
            q = qkv[:, 0:HIDDEN]
            kb = qkv[:, HIDDEN:2 * HIDDEN].astype(bf16)
            vb = qkv[:, 2 * HIDDEN:3 * HIDDEN].astype(bf16)

            # attention via head masks: no lane slices, no concats, all
            # batches handled at once through the block-diagonal bias.
            ctx = jnp.zeros((BS, HIDDEN), f32)
            for hh in range(N_HEADS):
                qm = (q * head_masks[hh]).astype(bf16)
                scores = lax.dot_general(
                    qm, kb, (((1,), (1,)), ((), ())),
                    preferred_element_type=f32) + attn_bias           # (BS, BS)
                scores = scores - jnp.max(scores, axis=-1, keepdims=True)
                p = jnp.exp(scores)
                p = p * pl.reciprocal(jnp.sum(p, axis=-1, keepdims=True),
                                      approx=True)
                ctx = ctx + head_masks[hh] * jnp.dot(
                    p.astype(bf16), vb, preferred_element_type=f32)

            # output projection + residual + LayerNorm (fused)
            attn_out = mm(ctx, wo_ref[l], vrow(base + 1, HIDDEN))
            h = layer_norm(attn_out + x,
                           vrow(base + 2, HIDDEN), vrow(base + 3, HIDDEN))

            # FFN + residual + LayerNorm (fused)
            ff = gelu(mm(h, w1_ref[l], vrow(base + 4, FFN_DIM)))
            ff = mm(ff, w2_ref[l], vrow(base + 5, HIDDEN))
            h = layer_norm(ff + h,
                           vrow(base + 6, HIDDEN), vrow(base + 7, HIDDEN))

        # ---- lane-dense classifier + log-softmax on ALL rows --------------
        # (fc_w zero-padded, fc_b padded with NEG_INF; the wrapper keeps only
        #  the CLS row of each sequence and the first NUM_LABELS lanes)
        logits = mm(h, fcw_ref[...], vecs_ref[ROW_FCB:ROW_FCB + 1, :])  # (BS, 128)
        m = jnp.max(logits, axis=-1, keepdims=True)
        sh = logits - m
        lse = jnp.log(jnp.sum(jnp.exp(sh), axis=-1, keepdims=True))
        out_ref[...] = sh - lse

    return kernel


# ------------------------------ forward pass --------------------------------
def forward(packed, input_ids, attention_mask):
    B, S = input_ids.shape
    BS = B * S

    ids = input_ids.reshape(BS, 1).astype(jnp.int32)

    # block-diagonal (same sequence) + key-validity additive bias, (BS, BS)
    key_valid = (attention_mask != 0).reshape(1, BS)
    bid = jnp.repeat(jnp.arange(B, dtype=jnp.int32), S)
    same_seq = bid[:, None] == bid[None, :]
    attn_bias = jnp.where(same_seq & key_valid, 0.0, NEG_INF).astype(jnp.float32)

    inputs = (
        ids, attn_bias,
        packed["word_emb"], packed["pos_emb"],
        packed["wqkv"], packed["wo"], packed["w1"], packed["w2"],
        packed["fc_w"], packed["vecs"],
    )

    out_full = pl.pallas_call(
        _make_kernel(B, S),
        grid=(1,),
        out_shape=jax.ShapeDtypeStruct((BS, LANE), jnp.float32),
        in_specs=[_full_spec(t.shape) for t in inputs],
        out_specs=_full_spec((BS, LANE)),
        compiler_params=pltpu.CompilerParams(
            dimension_semantics=("arbitrary",)),
    )(*inputs)

    # CLS row of each sequence, real label columns only
    return out_full.reshape(B, S, LANE)[:, 0, :NUM_LABELS]


# --------------------------------- main --------------------------------------
if __name__ == "__main__":
    key = jax.random.PRNGKey(0)
    pkey, ikey = jax.random.split(key)
    params = init_params(pkey)
    packed = pack_params(params)

    B, S = 2, 8
    input_ids = jax.random.randint(ikey, (B, S), 0, VOCAB, dtype=jnp.int32)
    attention_mask = jnp.ones((B, S), dtype=jnp.int32).at[1, 6:].set(0)

    log_probs = jax.jit(forward)(packed, input_ids, attention_mask)
    log_probs = jax.block_until_ready(log_probs)

    assert log_probs.shape == (B, NUM_LABELS)
    assert bool(jnp.all(jnp.isfinite(log_probs)))
    # log-softmax rows should sum to ~1 in probability space
    assert bool(jnp.allclose(jnp.sum(jnp.exp(log_probs), axis=1), 1.0, atol=1e-4))
    print("KERNEL_OK")
</pallas_src>

<mosaic_0001>
module attributes {stable_mosaic.version = 11 : i64} {
  func.func @kernel(%arg0: i32, %arg1: memref<16x1xi32, #tpu.memory_space<vmem>>, %arg2: memref<16x16xf32, #tpu.memory_space<vmem>>, %arg3: memref<64x32xbf16, #tpu.memory_space<vmem>>, %arg4: memref<16x32xf32, #tpu.memory_space<vmem>>, %arg5: memref<2x32x96xbf16, #tpu.memory_space<vmem>>, %arg6: memref<2x32x32xbf16, #tpu.memory_space<vmem>>, %arg7: memref<2x32x128xbf16, #tpu.memory_space<vmem>>, %arg8: memref<2x128x32xbf16, #tpu.memory_space<vmem>>, %arg9: memref<32x128xbf16, #tpu.memory_space<vmem>>, %arg10: memref<24x128xf32, #tpu.memory_space<vmem>>, %arg11: memref<16x128xf32, #tpu.memory_space<vmem>>) attributes {dimension_semantics = [#tpu.dimension_semantics<arbitrary>], iteration_bounds = array<i64: 1>, scalar_prefetch = 0 : i64, scratch_operands = 0 : i64, tpu.core_type = #tpu.core_type<tc>, window_params = [{pipeline_mode = #tpu.pipeline_mode<synchronous>, transform_indices = @transform_0, window_bounds = array<i64: 16, 1>}, {pipeline_mode = #tpu.pipeline_mode<synchronous>, transform_indices = @transform_1, window_bounds = array<i64: 16, 16>}, {pipeline_mode = #tpu.pipeline_mode<synchronous>, transform_indices = @transform_2, window_bounds = array<i64: 64, 32>}, {pipeline_mode = #tpu.pipeline_mode<synchronous>, transform_indices = @transform_3, window_bounds = array<i64: 16, 32>}, {pipeline_mode = #tpu.pipeline_mode<synchronous>, transform_indices = @transform_4, window_bounds = array<i64: 2, 32, 96>}, {pipeline_mode = #tpu.pipeline_mode<synchronous>, transform_indices = @transform_5, window_bounds = array<i64: 2, 32, 32>}, {pipeline_mode = #tpu.pipeline_mode<synchronous>, transform_indices = @transform_6, window_bounds = array<i64: 2, 32, 128>}, {pipeline_mode = #tpu.pipeline_mode<synchronous>, transform_indices = @transform_7, window_bounds = array<i64: 2, 128, 32>}, {pipeline_mode = #tpu.pipeline_mode<synchronous>, transform_indices = @transform_8, window_bounds = array<i64: 32, 128>}, {pipeline_mode = #tpu.pipeline_mode<synchronous>, transform_indices = @transform_9, window_bounds = array<i64: 24, 128>}, {pipeline_mode = #tpu.pipeline_mode<synchronous>, transform_indices = @transform_10, window_bounds = array<i64: 16, 128>}]} {
    %c0 = arith.constant 0 : index
    %c0_0 = arith.constant 0 : index
    %0 = vector.load %arg1[%c0, %c0_0] : memref<16x1xi32, #tpu.memory_space<vmem>>, vector<16x1xi32>
    %1 = tpu.iota {dimensions = array<i32: 1>} : vector<16x64xi32>
    %2 = vector.broadcast %0 : vector<16x1xi32> to vector<16x64xi32>
    %3 = arith.cmpi eq, %2, %1 : vector<16x64xi32>
    %4 = arith.extui %3 : vector<16x64xi1> to vector<16x64xi32>
    %5 = arith.sitofp %4 : vector<16x64xi32> to vector<16x64xf32>
    %6 = arith.truncf %5 : vector<16x64xf32> to vector<16x64xbf16>
    %c0_1 = arith.constant 0 : index
    %c0_2 = arith.constant 0 : index
    %7 = vector.load %arg3[%c0_1, %c0_2] : memref<64x32xbf16, #tpu.memory_space<vmem>>, vector<64x32xbf16>
    %cst = arith.constant dense<0.000000e+00> : vector<16x32xf32>
    %8 = tpu.matmul %6, %7, %cst {dimension_numbers = #tpu.dot_dimension_numbers<[1], [0], [0], [1], [0, 0, 1, 1], [], []>} : vector<16x64xbf16>, vector<64x32xbf16>, vector<16x32xf32> -> vector<16x32xf32>
    %c0_3 = arith.constant 0 : index
    %c0_4 = arith.constant 0 : index
    %9 = vector.load %arg4[%c0_3, %c0_4] : memref<16x32xf32, #tpu.memory_space<vmem>>, vector<8x32xf32>
    %10 = tpu.concatenate %9, %9 in 0 : vector<8x32xf32>, vector<8x32xf32> -> vector<16x32xf32>
    %11 = arith.addf %8, %10 : vector<16x32xf32>
    %c0_5 = arith.constant 0 : index
    %c0_6 = arith.constant 0 : index
    %12 = vector.load %arg10[%c0_5, %c0_6] : memref<24x128xf32, #tpu.memory_space<vmem>>, vector<1x32xf32>
    %c1 = arith.constant 1 : index
    %c0_7 = arith.constant 0 : index
    %13 = vector.load %arg10[%c1, %c0_7] : memref<24x128xf32, #tpu.memory_space<vmem>>, vector<1x32xf32>
    %cst_8 = arith.constant dense<0.000000e+00> : vector<16xf32>
    %14 = vector.multi_reduction <add>, %11, %cst_8 [1] : vector<16x32xf32> to vector<16xf32>
    %15 = vector.shape_cast %14 : vector<16xf32> to vector<16x1xf32>
    %cst_9 = arith.constant 3.200000e+01 : f32
    %16 = vector.broadcast %cst_9 : f32 to vector<16x1xf32>
    %17 = arith.divf %15, %16 : vector<16x1xf32>
    %18 = vector.broadcast %17 : vector<16x1xf32> to vector<16x32xf32>
    %19 = arith.subf %11, %18 : vector<16x32xf32>
    %20 = arith.mulf %19, %19 : vector<16x32xf32>
    %cst_10 = arith.constant dense<0.000000e+00> : vector<16xf32>
    %21 = vector.multi_reduction <add>, %20, %cst_10 [1] : vector<16x32xf32> to vector<16xf32>
    %22 = vector.shape_cast %21 : vector<16xf32> to vector<16x1xf32>
    %cst_11 = arith.constant 3.200000e+01 : f32
    %23 = vector.broadcast %cst_11 : f32 to vector<16x1xf32>
    %24 = arith.divf %22, %23 : vector<16x1xf32>
    %25 = vector.broadcast %17 : vector<16x1xf32> to vector<16x32xf32>
    %26 = arith.subf %11, %25 : vector<16x32xf32>
    %cst_12 = arith.constant 9.99999996E-13 : f32
    %27 = vector.broadcast %cst_12 : f32 to vector<16x1xf32>
    %28 = arith.addf %24, %27 : vector<16x1xf32>
    %29 = math.rsqrt %28 : vector<16x1xf32>
    %30 = vector.broadcast %29 : vector<16x1xf32> to vector<16x32xf32>
    %31 = arith.mulf %26, %30 : vector<16x32xf32>
    %32 = vector.broadcast %12 : vector<1x32xf32> to vector<16x32xf32>
    %33 = arith.mulf %31, %32 : vector<16x32xf32>
    %34 = vector.broadcast %13 : vector<1x32xf32> to vector<16x32xf32>
    %35 = arith.addf %33, %34 : vector<16x32xf32>
    %c0_13 = arith.constant 0 : index
    %c0_14 = arith.constant 0 : index
    %36 = vector.load %arg2[%c0_13, %c0_14] : memref<16x16xf32, #tpu.memory_space<vmem>>, vector<16x16xf32>
    %37 = tpu.iota {dimensions = array<i32: 1>} : vector<1x32xi32>
    %c0_i32 = arith.constant 0 : i32
    %38 = vector.broadcast %c0_i32 : i32 to vector<1x32xi32>
    %39 = arith.cmpi sge, %37, %38 : vector<1x32xi32>
    %c8_i32 = arith.constant 8 : i32
    %40 = vector.broadcast %c8_i32 : i32 to vector<1x32xi32>
    %41 = arith.cmpi slt, %37, %40 : vector<1x32xi32>
    %42 = arith.andi %39, %41 : vector<1x32xi1>
    %43 = arith.extui %42 : vector<1x32xi1> to vector<1x32xi32>
    %44 = arith.sitofp %43 : vector<1x32xi32> to vector<1x32xf32>
    %c8_i32_15 = arith.constant 8 : i32
    %45 = vector.broadcast %c8_i32_15 : i32 to vector<1x32xi32>
    %46 = arith.cmpi sge, %37, %45 : vector<1x32xi32>
    %c16_i32 = arith.constant 16 : i32
    %47 = vector.broadcast %c16_i32 : i32 to vector<1x32xi32>
    %48 = arith.cmpi slt, %37, %47 : vector<1x32xi32>
    %49 = arith.andi %46, %48 : vector<1x32xi1>
    %50 = arith.extui %49 : vector<1x32xi1> to vector<1x32xi32>
    %51 = arith.sitofp %50 : vector<1x32xi32> to vector<1x32xf32>
    %c16_i32_16 = arith.constant 16 : i32
    %52 = vector.broadcast %c16_i32_16 : i32 to vector<1x32xi32>
    %53 = arith.cmpi sge, %37, %52 : vector<1x32xi32>
    %c24_i32 = arith.constant 24 : i32
    %54 = vector.broadcast %c24_i32 : i32 to vector<1x32xi32>
    %55 = arith.cmpi slt, %37, %54 : vector<1x32xi32>
    %56 = arith.andi %53, %55 : vector<1x32xi1>
    %57 = arith.extui %56 : vector<1x32xi1> to vector<1x32xi32>
    %58 = arith.sitofp %57 : vector<1x32xi32> to vector<1x32xf32>
    %c24_i32_17 = arith.constant 24 : i32
    %59 = vector.broadcast %c24_i32_17 : i32 to vector<1x32xi32>
    %60 = arith.cmpi sge, %37, %59 : vector<1x32xi32>
    %c32_i32 = arith.constant 32 : i32
    %61 = vector.broadcast %c32_i32 : i32 to vector<1x32xi32>
    %62 = arith.cmpi slt, %37, %61 : vector<1x32xi32>
    %63 = arith.andi %60, %62 : vector<1x32xi1>
    %64 = arith.extui %63 : vector<1x32xi1> to vector<1x32xi32>
    %65 = arith.sitofp %64 : vector<1x32xi32> to vector<1x32xf32>
    %c0_18 = arith.constant 0 : index
    %c0_19 = arith.constant 0 : index
    %c0_20 = arith.constant 0 : index
    %66 = vector.load %arg5[%c0_18, %c0_19, %c0_20] : memref<2x32x96xbf16, #tpu.memory_space<vmem>>, vector<1x32x96xbf16>
    %67 = vector.shape_cast %66 : vector<1x32x96xbf16> to vector<32x96xbf16>
    %c2 = arith.constant 2 : index
    %c0_21 = arith.constant 0 : index
    %68 = vector.load %arg10[%c2, %c0_21] : memref<24x128xf32, #tpu.memory_space<vmem>>, vector<1x96xf32>
    %69 = arith.truncf %35 : vector<16x32xf32> to vector<16x32xbf16>
    %cst_22 = arith.constant dense<0.000000e+00> : vector<16x96xf32>
    %70 = tpu.matmul %69, %67, %cst_22 {dimension_numbers = #tpu.dot_dimension_numbers<[1], [0], [0], [1], [0, 0, 1, 1], [], []>} : vector<16x32xbf16>, vector<32x96xbf16>, vector<16x96xf32> -> vector<16x96xf32>
    %71 = vector.broadcast %68 : vector<1x96xf32> to vector<16x96xf32>
    %72 = arith.addf %70, %71 : vector<16x96xf32>
    %73 = vector.extract_strided_slice %72 {offsets = [0, 0], sizes = [16, 32], strides = [1, 1]} : vector<16x96xf32> to vector<16x32xf32>
    %74 = vector.extract_strided_slice %72 {offsets = [0, 32], sizes = [16, 32], strides = [1, 1]} : vector<16x96xf32> to vector<16x32xf32>
    %75 = arith.truncf %74 : vector<16x32xf32> to vector<16x32xbf16>
    %76 = vector.extract_strided_slice %72 {offsets = [0, 64], sizes = [16, 32], strides = [1, 1]} : vector<16x96xf32> to vector<16x32xf32>
    %77 = arith.truncf %76 : vector<16x32xf32> to vector<16x32xbf16>
    %cst_23 = arith.constant 0.000000e+00 : f32
    %78 = vector.broadcast %cst_23 : f32 to vector<16x32xf32>
    %79 = vector.broadcast %44 : vector<1x32xf32> to vector<16x32xf32>
    %80 = arith.mulf %73, %79 : vector<16x32xf32>
    %81 = arith.truncf %80 : vector<16x32xf32> to vector<16x32xbf16>
    %cst_24 = arith.constant dense<0.000000e+00> : vector<16x16xf32>
    %82 = tpu.matmul %81, %75, %cst_24 {dimension_numbers = #tpu.dot_dimension_numbers<[1], [1], [0], [0], [0, 0, 1, 0], [], []>} : vector<16x32xbf16>, vector<16x32xbf16>, vector<16x16xf32> -> vector<16x16xf32>
    %83 = arith.addf %82, %36 : vector<16x16xf32>
    %cst_25 = arith.constant dense<0xFF800000> : vector<16xf32>
    %84 = vector.multi_reduction <maximumf>, %83, %cst_25 [1] : vector<16x16xf32> to vector<16xf32>
    %85 = vector.shape_cast %84 : vector<16xf32> to vector<16x1xf32>
    %86 = vector.broadcast %85 : vector<16x1xf32> to vector<16x16xf32>
    %87 = arith.subf %83, %86 : vector<16x16xf32>
    %88 = math.exp %87 : vector<16x16xf32>
    %cst_26 = arith.constant dense<0.000000e+00> : vector<16xf32>
    %89 = vector.multi_reduction <add>, %88, %cst_26 [1] : vector<16x16xf32> to vector<16xf32>
    %90 = vector.shape_cast %89 : vector<16xf32> to vector<16x1xf32>
    %91 = tpu.reciprocal %90 {approx = true} : vector<16x1xf32> -> vector<16x1xf32>
    %92 = vector.broadcast %91 : vector<16x1xf32> to vector<16x16xf32>
    %93 = arith.mulf %88, %92 : vector<16x16xf32>
    %94 = arith.truncf %93 : vector<16x16xf32> to vector<16x16xbf16>
    %cst_27 = arith.constant dense<0.000000e+00> : vector<16x32xf32>
    %95 = tpu.matmul %94, %77, %cst_27 {dimension_numbers = #tpu.dot_dimension_numbers<[1], [0], [0], [1], [0, 0, 1, 1], [], []>} : vector<16x16xbf16>, vector<16x32xbf16>, vector<16x32xf32> -> vector<16x32xf32>
    %96 = vector.broadcast %44 : vector<1x32xf32> to vector<16x32xf32>
    %97 = arith.mulf %96, %95 : vector<16x32xf32>
    %98 = arith.addf %78, %97 : vector<16x32xf32>
    %99 = vector.broadcast %51 : vector<1x32xf32> to vector<16x32xf32>
    %100 = arith.mulf %73, %99 : vector<16x32xf32>
    %101 = arith.truncf %100 : vector<16x32xf32> to vector<16x32xbf16>
    %cst_28 = arith.constant dense<0.000000e+00> : vector<16x16xf32>
    %102 = tpu.matmul %101, %75, %cst_28 {dimension_numbers = #tpu.dot_dimension_numbers<[1], [1], [0], [0], [0, 0, 1, 0], [], []>} : vector<16x32xbf16>, vector<16x32xbf16>, vector<16x16xf32> -> vector<16x16xf32>
    %103 = arith.addf %102, %36 : vector<16x16xf32>
    %cst_29 = arith.constant dense<0xFF800000> : vector<16xf32>
    %104 = vector.multi_reduction <maximumf>, %103, %cst_29 [1] : vector<16x16xf32> to vector<16xf32>
    %105 = vector.shape_cast %104 : vector<16xf32> to vector<16x1xf32>
    %106 = vector.broadcast %105 : vector<16x1xf32> to vector<16x16xf32>
    %107 = arith.subf %103, %106 : vector<16x16xf32>
    %108 = math.exp %107 : vector<16x16xf32>
    %cst_30 = arith.constant dense<0.000000e+00> : vector<16xf32>
    %109 = vector.multi_reduction <add>, %108, %cst_30 [1] : vector<16x16xf32> to vector<16xf32>
    %110 = vector.shape_cast %109 : vector<16xf32> to vector<16x1xf32>
    %111 = tpu.reciprocal %110 {approx = true} : vector<16x1xf32> -> vector<16x1xf32>
    %112 = vector.broadcast %111 : vector<16x1xf32> to vector<16x16xf32>
    %113 = arith.mulf %108, %112 : vector<16x16xf32>
    %114 = arith.truncf %113 : vector<16x16xf32> to vector<16x16xbf16>
    %cst_31 = arith.constant dense<0.000000e+00> : vector<16x32xf32>
    %115 = tpu.matmul %114, %77, %cst_31 {dimension_numbers = #tpu.dot_dimension_numbers<[1], [0], [0], [1], [0, 0, 1, 1], [], []>} : vector<16x16xbf16>, vector<16x32xbf16>, vector<16x32xf32> -> vector<16x32xf32>
    %116 = vector.broadcast %51 : vector<1x32xf32> to vector<16x32xf32>
    %117 = arith.mulf %116, %115 : vector<16x32xf32>
    %118 = arith.addf %98, %117 : vector<16x32xf32>
    %119 = vector.broadcast %58 : vector<1x32xf32> to vector<16x32xf32>
    %120 = arith.mulf %73, %119 : vector<16x32xf32>
    %121 = arith.truncf %120 : vector<16x32xf32> to vector<16x32xbf16>
    %cst_32 = arith.constant dense<0.000000e+00> : vector<16x16xf32>
    %122 = tpu.matmul %121, %75, %cst_32 {dimension_numbers = #tpu.dot_dimension_numbers<[1], [1], [0], [0], [0, 0, 1, 0], [], []>} : vector<16x32xbf16>, vector<16x32xbf16>, vector<16x16xf32> -> vector<16x16xf32>
    %123 = arith.addf %122, %36 : vector<16x16xf32>
    %cst_33 = arith.constant dense<0xFF800000> : vector<16xf32>
    %124 = vector.multi_reduction <maximumf>, %123, %cst_33 [1] : vector<16x16xf32> to vector<16xf32>
    %125 = vector.shape_cast %124 : vector<16xf32> to vector<16x1xf32>
    %126 = vector.broadcast %125 : vector<16x1xf32> to vector<16x16xf32>
    %127 = arith.subf %123, %126 : vector<16x16xf32>
    %128 = math.exp %127 : vector<16x16xf32>
    %cst_34 = arith.constant dense<0.000000e+00> : vector<16xf32>
    %129 = vector.multi_reduction <add>, %128, %cst_34 [1] : vector<16x16xf32> to vector<16xf32>
    %130 = vector.shape_cast %129 : vector<16xf32> to vector<16x1xf32>
    %131 = tpu.reciprocal %130 {approx = true} : vector<16x1xf32> -> vector<16x1xf32>
    %132 = vector.broadcast %131 : vector<16x1xf32> to vector<16x16xf32>
    %133 = arith.mulf %128, %132 : vector<16x16xf32>
    %134 = arith.truncf %133 : vector<16x16xf32> to vector<16x16xbf16>
    %cst_35 = arith.constant dense<0.000000e+00> : vector<16x32xf32>
    %135 = tpu.matmul %134, %77, %cst_35 {dimension_numbers = #tpu.dot_dimension_numbers<[1], [0], [0], [1], [0, 0, 1, 1], [], []>} : vector<16x16xbf16>, vector<16x32xbf16>, vector<16x32xf32> -> vector<16x32xf32>
    %136 = vector.broadcast %58 : vector<1x32xf32> to vector<16x32xf32>
    %137 = arith.mulf %136, %135 : vector<16x32xf32>
    %138 = arith.addf %118, %137 : vector<16x32xf32>
    %139 = vector.broadcast %65 : vector<1x32xf32> to vector<16x32xf32>
    %140 = arith.mulf %73, %139 : vector<16x32xf32>
    %141 = arith.truncf %140 : vector<16x32xf32> to vector<16x32xbf16>
    %cst_36 = arith.constant dense<0.000000e+00> : vector<16x16xf32>
    %142 = tpu.matmul %141, %75, %cst_36 {dimension_numbers = #tpu.dot_dimension_numbers<[1], [1], [0], [0], [0, 0, 1, 0], [], []>} : vector<16x32xbf16>, vector<16x32xbf16>, vector<16x16xf32> -> vector<16x16xf32>
    %143 = arith.addf %142, %36 : vector<16x16xf32>
    %cst_37 = arith.constant dense<0xFF800000> : vector<16xf32>
    %144 = vector.multi_reduction <maximumf>, %143, %cst_37 [1] : vector<16x16xf32> to vector<16xf32>
    %145 = vector.shape_cast %144 : vector<16xf32> to vector<16x1xf32>
    %146 = vector.broadcast %145 : vector<16x1xf32> to vector<16x16xf32>
    %147 = arith.subf %143, %146 : vector<16x16xf32>
    %148 = math.exp %147 : vector<16x16xf32>
    %cst_38 = arith.constant dense<0.000000e+00> : vector<16xf32>
    %149 = vector.multi_reduction <add>, %148, %cst_38 [1] : vector<16x16xf32> to vector<16xf32>
    %150 = vector.shape_cast %149 : vector<16xf32> to vector<16x1xf32>
    %151 = tpu.reciprocal %150 {approx = true} : vector<16x1xf32> -> vector<16x1xf32>
    %152 = vector.broadcast %151 : vector<16x1xf32> to vector<16x16xf32>
    %153 = arith.mulf %148, %152 : vector<16x16xf32>
    %154 = arith.truncf %153 : vector<16x16xf32> to vector<16x16xbf16>
    %cst_39 = arith.constant dense<0.000000e+00> : vector<16x32xf32>
    %155 = tpu.matmul %154, %77, %cst_39 {dimension_numbers = #tpu.dot_dimension_numbers<[1], [0], [0], [1], [0, 0, 1, 1], [], []>} : vector<16x16xbf16>, vector<16x32xbf16>, vector<16x32xf32> -> vector<16x32xf32>
    %156 = vector.broadcast %65 : vector<1x32xf32> to vector<16x32xf32>
    %157 = arith.mulf %156, %155 : vector<16x32xf32>
    %158 = arith.addf %138, %157 : vector<16x32xf32>
    %c0_40 = arith.constant 0 : index
    %c0_41 = arith.constant 0 : index
    %c0_42 = arith.constant 0 : index
    %159 = vector.load %arg6[%c0_40, %c0_41, %c0_42] : memref<2x32x32xbf16, #tpu.memory_space<vmem>>, vector<1x32x32xbf16>
    %160 = vector.shape_cast %159 : vector<1x32x32xbf16> to vector<32x32xbf16>
    %c3 = arith.constant 3 : index
    %c0_43 = arith.constant 0 : index
    %161 = vector.load %arg10[%c3, %c0_43] : memref<24x128xf32, #tpu.memory_space<vmem>>, vector<1x32xf32>
    %162 = arith.truncf %158 : vector<16x32xf32> to vector<16x32xbf16>
    %cst_44 = arith.constant dense<0.000000e+00> : vector<16x32xf32>
    %163 = tpu.matmul %162, %160, %cst_44 {dimension_numbers = #tpu.dot_dimension_numbers<[1], [0], [0], [1], [0, 0, 1, 1], [], []>} : vector<16x32xbf16>, vector<32x32xbf16>, vector<16x32xf32> -> vector<16x32xf32>
    %164 = vector.broadcast %161 : vector<1x32xf32> to vector<16x32xf32>
    %165 = arith.addf %163, %164 : vector<16x32xf32>
    %166 = arith.addf %165, %35 : vector<16x32xf32>
    %c4 = arith.constant 4 : index
    %c0_45 = arith.constant 0 : index
    %167 = vector.load %arg10[%c4, %c0_45] : memref<24x128xf32, #tpu.memory_space<vmem>>, vector<1x32xf32>
    %c5 = arith.constant 5 : index
    %c0_46 = arith.constant 0 : index
    %168 = vector.load %arg10[%c5, %c0_46] : memref<24x128xf32, #tpu.memory_space<vmem>>, vector<1x32xf32>
    %cst_47 = arith.constant dense<0.000000e+00> : vector<16xf32>
    %169 = vector.multi_reduction <add>, %166, %cst_47 [1] : vector<16x32xf32> to vector<16xf32>
    %170 = vector.shape_cast %169 : vector<16xf32> to vector<16x1xf32>
    %cst_48 = arith.constant 3.200000e+01 : f32
    %171 = vector.broadcast %cst_48 : f32 to vector<16x1xf32>
    %172 = arith.divf %170, %171 : vector<16x1xf32>
    %173 = vector.broadcast %172 : vector<16x1xf32> to vector<16x32xf32>
    %174 = arith.subf %166, %173 : vector<16x32xf32>
    %175 = arith.mulf %174, %174 : vector<16x32xf32>
    %cst_49 = arith.constant dense<0.000000e+00> : vector<16xf32>
    %176 = vector.multi_reduction <add>, %175, %cst_49 [1] : vector<16x32xf32> to vector<16xf32>
    %177 = vector.shape_cast %176 : vector<16xf32> to vector<16x1xf32>
    %cst_50 = arith.constant 3.200000e+01 : f32
    %178 = vector.broadcast %cst_50 : f32 to vector<16x1xf32>
    %179 = arith.divf %177, %178 : vector<16x1xf32>
    %180 = vector.broadcast %172 : vector<16x1xf32> to vector<16x32xf32>
    %181 = arith.subf %166, %180 : vector<16x32xf32>
    %cst_51 = arith.constant 9.99999996E-13 : f32
    %182 = vector.broadcast %cst_51 : f32 to vector<16x1xf32>
    %183 = arith.addf %179, %182 : vector<16x1xf32>
    %184 = math.rsqrt %183 : vector<16x1xf32>
    %185 = vector.broadcast %184 : vector<16x1xf32> to vector<16x32xf32>
    %186 = arith.mulf %181, %185 : vector<16x32xf32>
    %187 = vector.broadcast %167 : vector<1x32xf32> to vector<16x32xf32>
    %188 = arith.mulf %186, %187 : vector<16x32xf32>
    %189 = vector.broadcast %168 : vector<1x32xf32> to vector<16x32xf32>
    %190 = arith.addf %188, %189 : vector<16x32xf32>
    %c0_52 = arith.constant 0 : index
    %c0_53 = arith.constant 0 : index
    %c0_54 = arith.constant 0 : index
    %191 = vector.load %arg7[%c0_52, %c0_53, %c0_54] : memref<2x32x128xbf16, #tpu.memory_space<vmem>>, vector<1x32x128xbf16>
    %192 = vector.shape_cast %191 : vector<1x32x128xbf16> to vector<32x128xbf16>
    %c6 = arith.constant 6 : index
    %c0_55 = arith.constant 0 : index
    %193 = vector.load %arg10[%c6, %c0_55] : memref<24x128xf32, #tpu.memory_space<vmem>>, vector<1x128xf32>
    %194 = arith.truncf %190 : vector<16x32xf32> to vector<16x32xbf16>
    %cst_56 = arith.constant dense<0.000000e+00> : vector<16x128xf32>
    %195 = tpu.matmul %194, %192, %cst_56 {dimension_numbers = #tpu.dot_dimension_numbers<[1], [0], [0], [1], [0, 0, 1, 1], [], []>} : vector<16x32xbf16>, vector<32x128xbf16>, vector<16x128xf32> -> vector<16x128xf32>
    %196 = vector.broadcast %193 : vector<1x128xf32> to vector<16x128xf32>
    %197 = arith.addf %195, %196 : vector<16x128xf32>
    %cst_57 = arith.constant 5.000000e-01 : f32
    %198 = vector.broadcast %cst_57 : f32 to vector<16x128xf32>
    %199 = arith.mulf %198, %197 : vector<16x128xf32>
    %cst_58 = arith.constant 0.707106769 : f32
    %200 = vector.broadcast %cst_58 : f32 to vector<16x128xf32>
    %201 = arith.mulf %197, %200 : vector<16x128xf32>
    %202 = math.erf %201 : vector<16x128xf32>
    %cst_59 = arith.constant 1.000000e+00 : f32
    %203 = vector.broadcast %cst_59 : f32 to vector<16x128xf32>
    %204 = arith.addf %203, %202 : vector<16x128xf32>
    %205 = arith.mulf %199, %204 : vector<16x128xf32>
    %c0_60 = arith.constant 0 : index
    %c0_61 = arith.constant 0 : index
    %c0_62 = arith.constant 0 : index
    %206 = vector.load %arg8[%c0_60, %c0_61, %c0_62] : memref<2x128x32xbf16, #tpu.memory_space<vmem>>, vector<1x128x32xbf16>
    %207 = vector.shape_cast %206 : vector<1x128x32xbf16> to vector<128x32xbf16>
    %c7 = arith.constant 7 : index
    %c0_63 = arith.constant 0 : index
    %208 = vector.load %arg10[%c7, %c0_63] : memref<24x128xf32, #tpu.memory_space<vmem>>, vector<1x32xf32>
    %209 = arith.truncf %205 : vector<16x128xf32> to vector<16x128xbf16>
    %cst_64 = arith.constant dense<0.000000e+00> : vector<16x32xf32>
    %210 = tpu.matmul %209, %207, %cst_64 {dimension_numbers = #tpu.dot_dimension_numbers<[1], [0], [0], [1], [0, 0, 1, 1], [], []>} : vector<16x128xbf16>, vector<128x32xbf16>, vector<16x32xf32> -> vector<16x32xf32>
    %211 = vector.broadcast %208 : vector<1x32xf32> to vector<16x32xf32>
    %212 = arith.addf %210, %211 : vector<16x32xf32>
    %213 = arith.addf %212, %190 : vector<16x32xf32>
    %c8 = arith.constant 8 : index
    %c0_65 = arith.constant 0 : index
    %214 = vector.load %arg10[%c8, %c0_65] : memref<24x128xf32, #tpu.memory_space<vmem>>, vector<1x32xf32>
    %c9 = arith.constant 9 : index
    %c0_66 = arith.constant 0 : index
    %215 = vector.load %arg10[%c9, %c0_66] : memref<24x128xf32, #tpu.memory_space<vmem>>, vector<1x32xf32>
    %cst_67 = arith.constant dense<0.000000e+00> : vector<16xf32>
    %216 = vector.multi_reduction <add>, %213, %cst_67 [1] : vector<16x32xf32> to vector<16xf32>
    %217 = vector.shape_cast %216 : vector<16xf32> to vector<16x1xf32>
    %cst_68 = arith.constant 3.200000e+01 : f32
    %218 = vector.broadcast %cst_68 : f32 to vector<16x1xf32>
    %219 = arith.divf %217, %218 : vector<16x1xf32>
    %220 = vector.broadcast %219 : vector<16x1xf32> to vector<16x32xf32>
    %221 = arith.subf %213, %220 : vector<16x32xf32>
    %222 = arith.mulf %221, %221 : vector<16x32xf32>
    %cst_69 = arith.constant dense<0.000000e+00> : vector<16xf32>
    %223 = vector.multi_reduction <add>, %222, %cst_69 [1] : vector<16x32xf32> to vector<16xf32>
    %224 = vector.shape_cast %223 : vector<16xf32> to vector<16x1xf32>
    %cst_70 = arith.constant 3.200000e+01 : f32
    %225 = vector.broadcast %cst_70 : f32 to vector<16x1xf32>
    %226 = arith.divf %224, %225 : vector<16x1xf32>
    %227 = vector.broadcast %219 : vector<16x1xf32> to vector<16x32xf32>
    %228 = arith.subf %213, %227 : vector<16x32xf32>
    %cst_71 = arith.constant 9.99999996E-13 : f32
    %229 = vector.broadcast %cst_71 : f32 to vector<16x1xf32>
    %230 = arith.addf %226, %229 : vector<16x1xf32>
    %231 = math.rsqrt %230 : vector<16x1xf32>
    %232 = vector.broadcast %231 : vector<16x1xf32> to vector<16x32xf32>
    %233 = arith.mulf %228, %232 : vector<16x32xf32>
    %234 = vector.broadcast %214 : vector<1x32xf32> to vector<16x32xf32>
    %235 = arith.mulf %233, %234 : vector<16x32xf32>
    %236 = vector.broadcast %215 : vector<1x32xf32> to vector<16x32xf32>
    %237 = arith.addf %235, %236 : vector<16x32xf32>
    %c1_72 = arith.constant 1 : index
    %c0_73 = arith.constant 0 : index
    %c0_74 = arith.constant 0 : index
    %238 = vector.load %arg5[%c1_72, %c0_73, %c0_74] : memref<2x32x96xbf16, #tpu.memory_space<vmem>>, vector<1x32x96xbf16>
    %239 = vector.shape_cast %238 : vector<1x32x96xbf16> to vector<32x96xbf16>
    %c10 = arith.constant 10 : index
    %c0_75 = arith.constant 0 : index
    %240 = vector.load %arg10[%c10, %c0_75] : memref<24x128xf32, #tpu.memory_space<vmem>>, vector<1x96xf32>
    %241 = arith.truncf %237 : vector<16x32xf32> to vector<16x32xbf16>
    %cst_76 = arith.constant dense<0.000000e+00> : vector<16x96xf32>
    %242 = tpu.matmul %241, %239, %cst_76 {dimension_numbers = #tpu.dot_dimension_numbers<[1], [0], [0], [1], [0, 0, 1, 1], [], []>} : vector<16x32xbf16>, vector<32x96xbf16>, vector<16x96xf32> -> vector<16x96xf32>
    %243 = vector.broadcast %240 : vector<1x96xf32> to vector<16x96xf32>
    %244 = arith.addf %242, %243 : vector<16x96xf32>
    %245 = vector.extract_strided_slice %244 {offsets = [0, 0], sizes = [16, 32], strides = [1, 1]} : vector<16x96xf32> to vector<16x32xf32>
    %246 = vector.extract_strided_slice %244 {offsets = [0, 32], sizes = [16, 32], strides = [1, 1]} : vector<16x96xf32> to vector<16x32xf32>
    %247 = arith.truncf %246 : vector<16x32xf32> to vector<16x32xbf16>
    %248 = vector.extract_strided_slice %244 {offsets = [0, 64], sizes = [16, 32], strides = [1, 1]} : vector<16x96xf32> to vector<16x32xf32>
    %249 = arith.truncf %248 : vector<16x32xf32> to vector<16x32xbf16>
    %cst_77 = arith.constant 0.000000e+00 : f32
    %250 = vector.broadcast %cst_77 : f32 to vector<16x32xf32>
    %251 = vector.broadcast %44 : vector<1x32xf32> to vector<16x32xf32>
    %252 = arith.mulf %245, %251 : vector<16x32xf32>
    %253 = arith.truncf %252 : vector<16x32xf32> to vector<16x32xbf16>
    %cst_78 = arith.constant dense<0.000000e+00> : vector<16x16xf32>
    %254 = tpu.matmul %253, %247, %cst_78 {dimension_numbers = #tpu.dot_dimension_numbers<[1], [1], [0], [0], [0, 0, 1, 0], [], []>} : vector<16x32xbf16>, vector<16x32xbf16>, vector<16x16xf32> -> vector<16x16xf32>
    %255 = arith.addf %254, %36 : vector<16x16xf32>
    %cst_79 = arith.constant dense<0xFF800000> : vector<16xf32>
    %256 = vector.multi_reduction <maximumf>, %255, %cst_79 [1] : vector<16x16xf32> to vector<16xf32>
    %257 = vector.shape_cast %256 : vector<16xf32> to vector<16x1xf32>
    %258 = vector.broadcast %257 : vector<16x1xf32> to vector<16x16xf32>
    %259 = arith.subf %255, %258 : vector<16x16xf32>
    %260 = math.exp %259 : vector<16x16xf32>
    %cst_80 = arith.constant dense<0.000000e+00> : vector<16xf32>
    %261 = vector.multi_reduction <add>, %260, %cst_80 [1] : vector<16x16xf32> to vector<16xf32>
    %262 = vector.shape_cast %261 : vector<16xf32> to vector<16x1xf32>
    %263 = tpu.reciprocal %262 {approx = true} : vector<16x1xf32> -> vector<16x1xf32>
    %264 = vector.broadcast %263 : vector<16x1xf32> to vector<16x16xf32>
    %265 = arith.mulf %260, %264 : vector<16x16xf32>
    %266 = arith.truncf %265 : vector<16x16xf32> to vector<16x16xbf16>
    %cst_81 = arith.constant dense<0.000000e+00> : vector<16x32xf32>
    %267 = tpu.matmul %266, %249, %cst_81 {dimension_numbers = #tpu.dot_dimension_numbers<[1], [0], [0], [1], [0, 0, 1, 1], [], []>} : vector<16x16xbf16>, vector<16x32xbf16>, vector<16x32xf32> -> vector<16x32xf32>
    %268 = vector.broadcast %44 : vector<1x32xf32> to vector<16x32xf32>
    %269 = arith.mulf %268, %267 : vector<16x32xf32>
    %270 = arith.addf %250, %269 : vector<16x32xf32>
    %271 = vector.broadcast %51 : vector<1x32xf32> to vector<16x32xf32>
    %272 = arith.mulf %245, %271 : vector<16x32xf32>
    %273 = arith.truncf %272 : vector<16x32xf32> to vector<16x32xbf16>
    %cst_82 = arith.constant dense<0.000000e+00> : vector<16x16xf32>
    %274 = tpu.matmul %273, %247, %cst_82 {dimension_numbers = #tpu.dot_dimension_numbers<[1], [1], [0], [0], [0, 0, 1, 0], [], []>} : vector<16x32xbf16>, vector<16x32xbf16>, vector<16x16xf32> -> vector<16x16xf32>
    %275 = arith.addf %274, %36 : vector<16x16xf32>
    %cst_83 = arith.constant dense<0xFF800000> : vector<16xf32>
    %276 = vector.multi_reduction <maximumf>, %275, %cst_83 [1] : vector<16x16xf32> to vector<16xf32>
    %277 = vector.shape_cast %276 : vector<16xf32> to vector<16x1xf32>
    %278 = vector.broadcast %277 : vector<16x1xf32> to vector<16x16xf32>
    %279 = arith.subf %275, %278 : vector<16x16xf32>
    %280 = math.exp %279 : vector<16x16xf32>
    %cst_84 = arith.constant dense<0.000000e+00> : vector<16xf32>
    %281 = vector.multi_reduction <add>, %280, %cst_84 [1] : vector<16x16xf32> to vector<16xf32>
    %282 = vector.shape_cast %281 : vector<16xf32> to vector<16x1xf32>
    %283 = tpu.reciprocal %282 {approx = true} : vector<16x1xf32> -> vector<16x1xf32>
    %284 = vector.broadcast %283 : vector<16x1xf32> to vector<16x16xf32>
    %285 = arith.mulf %280, %284 : vector<16x16xf32>
    %286 = arith.truncf %285 : vector<16x16xf32> to vector<16x16xbf16>
    %cst_85 = arith.constant dense<0.000000e+00> : vector<16x32xf32>
    %287 = tpu.matmul %286, %249, %cst_85 {dimension_numbers = #tpu.dot_dimension_numbers<[1], [0], [0], [1], [0, 0, 1, 1], [], []>} : vector<16x16xbf16>, vector<16x32xbf16>, vector<16x32xf32> -> vector<16x32xf32>
    %288 = vector.broadcast %51 : vector<1x32xf32> to vector<16x32xf32>
    %289 = arith.mulf %288, %287 : vector<16x32xf32>
    %290 = arith.addf %270, %289 : vector<16x32xf32>
    %291 = vector.broadcast %58 : vector<1x32xf32> to vector<16x32xf32>
    %292 = arith.mulf %245, %291 : vector<16x32xf32>
    %293 = arith.truncf %292 : vector<16x32xf32> to vector<16x32xbf16>
    %cst_86 = arith.constant dense<0.000000e+00> : vector<16x16xf32>
    %294 = tpu.matmul %293, %247, %cst_86 {dimension_numbers = #tpu.dot_dimension_numbers<[1], [1], [0], [0], [0, 0, 1, 0], [], []>} : vector<16x32xbf16>, vector<16x32xbf16>, vector<16x16xf32> -> vector<16x16xf32>
    %295 = arith.addf %294, %36 : vector<16x16xf32>
    %cst_87 = arith.constant dense<0xFF800000> : vector<16xf32>
    %296 = vector.multi_reduction <maximumf>, %295, %cst_87 [1] : vector<16x16xf32> to vector<16xf32>
    %297 = vector.shape_cast %296 : vector<16xf32> to vector<16x1xf32>
    %298 = vector.broadcast %297 : vector<16x1xf32> to vector<16x16xf32>
    %299 = arith.subf %295, %298 : vector<16x16xf32>
    %300 = math.exp %299 : vector<16x16xf32>
    %cst_88 = arith.constant dense<0.000000e+00> : vector<16xf32>
    %301 = vector.multi_reduction <add>, %300, %cst_88 [1] : vector<16x16xf32> to vector<16xf32>
    %302 = vector.shape_cast %301 : vector<16xf32> to vector<16x1xf32>
    %303 = tpu.reciprocal %302 {approx = true} : vector<16x1xf32> -> vector<16x1xf32>
    %304 = vector.broadcast %303 : vector<16x1xf32> to vector<16x16xf32>
    %305 = arith.mulf %300, %304 : vector<16x16xf32>
    %306 = arith.truncf %305 : vector<16x16xf32> to vector<16x16xbf16>
    %cst_89 = arith.constant dense<0.000000e+00> : vector<16x32xf32>
    %307 = tpu.matmul %306, %249, %cst_89 {dimension_numbers = #tpu.dot_dimension_numbers<[1], [0], [0], [1], [0, 0, 1, 1], [], []>} : vector<16x16xbf16>, vector<16x32xbf16>, vector<16x32xf32> -> vector<16x32xf32>
    %308 = vector.broadcast %58 : vector<1x32xf32> to vector<16x32xf32>
    %309 = arith.mulf %308, %307 : vector<16x32xf32>
    %310 = arith.addf %290, %309 : vector<16x32xf32>
    %311 = vector.broadcast %65 : vector<1x32xf32> to vector<16x32xf32>
    %312 = arith.mulf %245, %311 : vector<16x32xf32>
    %313 = arith.truncf %312 : vector<16x32xf32> to vector<16x32xbf16>
    %cst_90 = arith.constant dense<0.000000e+00> : vector<16x16xf32>
    %314 = tpu.matmul %313, %247, %cst_90 {dimension_numbers = #tpu.dot_dimension_numbers<[1], [1], [0], [0], [0, 0, 1, 0], [], []>} : vector<16x32xbf16>, vector<16x32xbf16>, vector<16x16xf32> -> vector<16x16xf32>
    %315 = arith.addf %314, %36 : vector<16x16xf32>
    %cst_91 = arith.constant dense<0xFF800000> : vector<16xf32>
    %316 = vector.multi_reduction <maximumf>, %315, %cst_91 [1] : vector<16x16xf32> to vector<16xf32>
    %317 = vector.shape_cast %316 : vector<16xf32> to vector<16x1xf32>
    %318 = vector.broadcast %317 : vector<16x1xf32> to vector<16x16xf32>
    %319 = arith.subf %315, %318 : vector<16x16xf32>
    %320 = math.exp %319 : vector<16x16xf32>
    %cst_92 = arith.constant dense<0.000000e+00> : vector<16xf32>
    %321 = vector.multi_reduction <add>, %320, %cst_92 [1] : vector<16x16xf32> to vector<16xf32>
    %322 = vector.shape_cast %321 : vector<16xf32> to vector<16x1xf32>
    %323 = tpu.reciprocal %322 {approx = true} : vector<16x1xf32> -> vector<16x1xf32>
    %324 = vector.broadcast %323 : vector<16x1xf32> to vector<16x16xf32>
    %325 = arith.mulf %320, %324 : vector<16x16xf32>
    %326 = arith.truncf %325 : vector<16x16xf32> to vector<16x16xbf16>
    %cst_93 = arith.constant dense<0.000000e+00> : vector<16x32xf32>
    %327 = tpu.matmul %326, %249, %cst_93 {dimension_numbers = #tpu.dot_dimension_numbers<[1], [0], [0], [1], [0, 0, 1, 1], [], []>} : vector<16x16xbf16>, vector<16x32xbf16>, vector<16x32xf32> -> vector<16x32xf32>
    %328 = vector.broadcast %65 : vector<1x32xf32> to vector<16x32xf32>
    %329 = arith.mulf %328, %327 : vector<16x32xf32>
    %330 = arith.addf %310, %329 : vector<16x32xf32>
    %c1_94 = arith.constant 1 : index
    %c0_95 = arith.constant 0 : index
    %c0_96 = arith.constant 0 : index
    %331 = vector.load %arg6[%c1_94, %c0_95, %c0_96] : memref<2x32x32xbf16, #tpu.memory_space<vmem>>, vector<1x32x32xbf16>
    %332 = vector.shape_cast %331 : vector<1x32x32xbf16> to vector<32x32xbf16>
    %c11 = arith.constant 11 : index
    %c0_97 = arith.constant 0 : index
    %333 = vector.load %arg10[%c11, %c0_97] : memref<24x128xf32, #tpu.memory_space<vmem>>, vector<1x32xf32>
    %334 = arith.truncf %330 : vector<16x32xf32> to vector<16x32xbf16>
    %cst_98 = arith.constant dense<0.000000e+00> : vector<16x32xf32>
    %335 = tpu.matmul %334, %332, %cst_98 {dimension_numbers = #tpu.dot_dimension_numbers<[1], [0], [0], [1], [0, 0, 1, 1], [], []>} : vector<16x32xbf16>, vector<32x32xbf16>, vector<16x32xf32> -> vector<16x32xf32>
    %336 = vector.broadcast %333 : vector<1x32xf32> to vector<16x32xf32>
    %337 = arith.addf %335, %336 : vector<16x32xf32>
    %338 = arith.addf %337, %237 : vector<16x32xf32>
    %c12 = arith.constant 12 : index
    %c0_99 = arith.constant 0 : index
    %339 = vector.load %arg10[%c12, %c0_99] : memref<24x128xf32, #tpu.memory_space<vmem>>, vector<1x32xf32>
    %c13 = arith.constant 13 : index
    %c0_100 = arith.constant 0 : index
    %340 = vector.load %arg10[%c13, %c0_100] : memref<24x128xf32, #tpu.memory_space<vmem>>, vector<1x32xf32>
    %cst_101 = arith.constant dense<0.000000e+00> : vector<16xf32>
    %341 = vector.multi_reduction <add>, %338, %cst_101 [1] : vector<16x32xf32> to vector<16xf32>
    %342 = vector.shape_cast %341 : vector<16xf32> to vector<16x1xf32>
    %cst_102 = arith.constant 3.200000e+01 : f32
    %343 = vector.broadcast %cst_102 : f32 to vector<16x1xf32>
    %344 = arith.divf %342, %343 : vector<16x1xf32>
    %345 = vector.broadcast %344 : vector<16x1xf32> to vector<16x32xf32>
    %346 = arith.subf %338, %345 : vector<16x32xf32>
    %347 = arith.mulf %346, %346 : vector<16x32xf32>
    %cst_103 = arith.constant dense<0.000000e+00> : vector<16xf32>
    %348 = vector.multi_reduction <add>, %347, %cst_103 [1] : vector<16x32xf32> to vector<16xf32>
    %349 = vector.shape_cast %348 : vector<16xf32> to vector<16x1xf32>
    %cst_104 = arith.constant 3.200000e+01 : f32
    %350 = vector.broadcast %cst_104 : f32 to vector<16x1xf32>
    %351 = arith.divf %349, %350 : vector<16x1xf32>
    %352 = vector.broadcast %344 : vector<16x1xf32> to vector<16x32xf32>
    %353 = arith.subf %338, %352 : vector<16x32xf32>
    %cst_105 = arith.constant 9.99999996E-13 : f32
    %354 = vector.broadcast %cst_105 : f32 to vector<16x1xf32>
    %355 = arith.addf %351, %354 : vector<16x1xf32>
    %356 = math.rsqrt %355 : vector<16x1xf32>
    %357 = vector.broadcast %356 : vector<16x1xf32> to vector<16x32xf32>
    %358 = arith.mulf %353, %357 : vector<16x32xf32>
    %359 = vector.broadcast %339 : vector<1x32xf32> to vector<16x32xf32>
    %360 = arith.mulf %358, %359 : vector<16x32xf32>
    %361 = vector.broadcast %340 : vector<1x32xf32> to vector<16x32xf32>
    %362 = arith.addf %360, %361 : vector<16x32xf32>
    %c1_106 = arith.constant 1 : index
    %c0_107 = arith.constant 0 : index
    %c0_108 = arith.constant 0 : index
    %363 = vector.load %arg7[%c1_106, %c0_107, %c0_108] : memref<2x32x128xbf16, #tpu.memory_space<vmem>>, vector<1x32x128xbf16>
    %364 = vector.shape_cast %363 : vector<1x32x128xbf16> to vector<32x128xbf16>
    %c14 = arith.constant 14 : index
    %c0_109 = arith.constant 0 : index
    %365 = vector.load %arg10[%c14, %c0_109] : memref<24x128xf32, #tpu.memory_space<vmem>>, vector<1x128xf32>
    %366 = arith.truncf %362 : vector<16x32xf32> to vector<16x32xbf16>
    %cst_110 = arith.constant dense<0.000000e+00> : vector<16x128xf32>
    %367 = tpu.matmul %366, %364, %cst_110 {dimension_numbers = #tpu.dot_dimension_numbers<[1], [0], [0], [1], [0, 0, 1, 1], [], []>} : vector<16x32xbf16>, vector<32x128xbf16>, vector<16x128xf32> -> vector<16x128xf32>
    %368 = vector.broadcast %365 : vector<1x128xf32> to vector<16x128xf32>
    %369 = arith.addf %367, %368 : vector<16x128xf32>
    %cst_111 = arith.constant 5.000000e-01 : f32
    %370 = vector.broadcast %cst_111 : f32 to vector<16x128xf32>
    %371 = arith.mulf %370, %369 : vector<16x128xf32>
    %cst_112 = arith.constant 0.707106769 : f32
    %372 = vector.broadcast %cst_112 : f32 to vector<16x128xf32>
    %373 = arith.mulf %369, %372 : vector<16x128xf32>
    %374 = math.erf %373 : vector<16x128xf32>
    %cst_113 = arith.constant 1.000000e+00 : f32
    %375 = vector.broadcast %cst_113 : f32 to vector<16x128xf32>
    %376 = arith.addf %375, %374 : vector<16x128xf32>
    %377 = arith.mulf %371, %376 : vector<16x128xf32>
    %c1_114 = arith.constant 1 : index
    %c0_115 = arith.constant 0 : index
    %c0_116 = arith.constant 0 : index
    %378 = vector.load %arg8[%c1_114, %c0_115, %c0_116] : memref<2x128x32xbf16, #tpu.memory_space<vmem>>, vector<1x128x32xbf16>
    %379 = vector.shape_cast %378 : vector<1x128x32xbf16> to vector<128x32xbf16>
    %c15 = arith.constant 15 : index
    %c0_117 = arith.constant 0 : index
    %380 = vector.load %arg10[%c15, %c0_117] : memref<24x128xf32, #tpu.memory_space<vmem>>, vector<1x32xf32>
    %381 = arith.truncf %377 : vector<16x128xf32> to vector<16x128xbf16>
    %cst_118 = arith.constant dense<0.000000e+00> : vector<16x32xf32>
    %382 = tpu.matmul %381, %379, %cst_118 {dimension_numbers = #tpu.dot_dimension_numbers<[1], [0], [0], [1], [0, 0, 1, 1], [], []>} : vector<16x128xbf16>, vector<128x32xbf16>, vector<16x32xf32> -> vector<16x32xf32>
    %383 = vector.broadcast %380 : vector<1x32xf32> to vector<16x32xf32>
    %384 = arith.addf %382, %383 : vector<16x32xf32>
    %385 = arith.addf %384, %362 : vector<16x32xf32>
    %c16 = arith.constant 16 : index
    %c0_119 = arith.constant 0 : index
    %386 = vector.load %arg10[%c16, %c0_119] : memref<24x128xf32, #tpu.memory_space<vmem>>, vector<1x32xf32>
    %c17 = arith.constant 17 : index
    %c0_120 = arith.constant 0 : index
    %387 = vector.load %arg10[%c17, %c0_120] : memref<24x128xf32, #tpu.memory_space<vmem>>, vector<1x32xf32>
    %cst_121 = arith.constant dense<0.000000e+00> : vector<16xf32>
    %388 = vector.multi_reduction <add>, %385, %cst_121 [1] : vector<16x32xf32> to vector<16xf32>
    %389 = vector.shape_cast %388 : vector<16xf32> to vector<16x1xf32>
    %cst_122 = arith.constant 3.200000e+01 : f32
    %390 = vector.broadcast %cst_122 : f32 to vector<16x1xf32>
    %391 = arith.divf %389, %390 : vector<16x1xf32>
    %392 = vector.broadcast %391 : vector<16x1xf32> to vector<16x32xf32>
    %393 = arith.subf %385, %392 : vector<16x32xf32>
    %394 = arith.mulf %393, %393 : vector<16x32xf32>
    %cst_123 = arith.constant dense<0.000000e+00> : vector<16xf32>
    %395 = vector.multi_reduction <add>, %394, %cst_123 [1] : vector<16x32xf32> to vector<16xf32>
    %396 = vector.shape_cast %395 : vector<16xf32> to vector<16x1xf32>
    %cst_124 = arith.constant 3.200000e+01 : f32
    %397 = vector.broadcast %cst_124 : f32 to vector<16x1xf32>
    %398 = arith.divf %396, %397 : vector<16x1xf32>
    %399 = vector.broadcast %391 : vector<16x1xf32> to vector<16x32xf32>
    %400 = arith.subf %385, %399 : vector<16x32xf32>
    %cst_125 = arith.constant 9.99999996E-13 : f32
    %401 = vector.broadcast %cst_125 : f32 to vector<16x1xf32>
    %402 = arith.addf %398, %401 : vector<16x1xf32>
    %403 = math.rsqrt %402 : vector<16x1xf32>
    %404 = vector.broadcast %403 : vector<16x1xf32> to vector<16x32xf32>
    %405 = arith.mulf %400, %404 : vector<16x32xf32>
    %406 = vector.broadcast %386 : vector<1x32xf32> to vector<16x32xf32>
    %407 = arith.mulf %405, %406 : vector<16x32xf32>
    %408 = vector.broadcast %387 : vector<1x32xf32> to vector<16x32xf32>
    %409 = arith.addf %407, %408 : vector<16x32xf32>
    %c0_126 = arith.constant 0 : index
    %c0_127 = arith.constant 0 : index
    %410 = vector.load %arg9[%c0_126, %c0_127] : memref<32x128xbf16, #tpu.memory_space<vmem>>, vector<32x128xbf16>
    %c18 = arith.constant 18 : index
    %c0_128 = arith.constant 0 : index
    %411 = vector.load %arg10[%c18, %c0_128] : memref<24x128xf32, #tpu.memory_space<vmem>>, vector<1x128xf32>
    %412 = arith.truncf %409 : vector<16x32xf32> to vector<16x32xbf16>
    %cst_129 = arith.constant dense<0.000000e+00> : vector<16x128xf32>
    %413 = tpu.matmul %412, %410, %cst_129 {dimension_numbers = #tpu.dot_dimension_numbers<[1], [0], [0], [1], [0, 0, 1, 1], [], []>} : vector<16x32xbf16>, vector<32x128xbf16>, vector<16x128xf32> -> vector<16x128xf32>
    %414 = vector.broadcast %411 : vector<1x128xf32> to vector<16x128xf32>
    %415 = arith.addf %413, %414 : vector<16x128xf32>
    %cst_130 = arith.constant dense<0xFF800000> : vector<16xf32>
    %416 = vector.multi_reduction <maximumf>, %415, %cst_130 [1] : vector<16x128xf32> to vector<16xf32>
    %417 = vector.shape_cast %416 : vector<16xf32> to vector<16x1xf32>
    %418 = vector.broadcast %417 : vector<16x1xf32> to vector<16x128xf32>
    %419 = arith.subf %415, %418 : vector<16x128xf32>
    %420 = math.exp %419 : vector<16x128xf32>
    %cst_131 = arith.constant dense<0.000000e+00> : vector<16xf32>
    %421 = vector.multi_reduction <add>, %420, %cst_131 [1] : vector<16x128xf32> to vector<16xf32>
    %422 = vector.shape_cast %421 : vector<16xf32> to vector<16x1xf32>
    %423 = math.log %422 : vector<16x1xf32>
    %424 = vector.broadcast %423 : vector<16x1xf32> to vector<16x128xf32>
    %425 = arith.subf %419, %424 : vector<16x128xf32>
    %c0_132 = arith.constant 0 : index
    %c0_133 = arith.constant 0 : index
    %426 = vector.load %arg11[%c0_132, %c0_133] : memref<16x128xf32, #tpu.memory_space<vmem>>, vector<16x128xf32>
    tpu.vector_store %arg11[%c0_132, %c0_133], %425 {strides = array<i32>} : memref<16x128xf32, #tpu.memory_space<vmem>>, vector<16x128xf32>,
    return
  }
  func.func @transform_0(%arg0: i32) -> (i32, i32) {
    %c0_i32 = arith.constant 0 : i32
    %c0_i32_0 = arith.constant 0 : i32
    %c0_i32_1 = arith.constant 0 : i32
    return %c0_i32, %c0_i32_0 : i32, i32
  }
  func.func @transform_1(%arg0: i32) -> (i32, i32) {
    %c0_i32 = arith.constant 0 : i32
    %c0_i32_0 = arith.constant 0 : i32
    %c0_i32_1 = arith.constant 0 : i32
    return %c0_i32, %c0_i32_0 : i32, i32
  }
  func.func @transform_2(%arg0: i32) -> (i32, i32) {
    %c0_i32 = arith.constant 0 : i32
    %c0_i32_0 = arith.constant 0 : i32
    %c0_i32_1 = arith.constant 0 : i32
    return %c0_i32, %c0_i32_0 : i32, i32
  }
  func.func @transform_3(%arg0: i32) -> (i32, i32) {
    %c0_i32 = arith.constant 0 : i32
    %c0_i32_0 = arith.constant 0 : i32
    %c0_i32_1 = arith.constant 0 : i32
    return %c0_i32, %c0_i32_0 : i32, i32
  }
  func.func @transform_4(%arg0: i32) -> (i32, i32, i32) {
    %c0_i32 = arith.constant 0 : i32
    %c0_i32_0 = arith.constant 0 : i32
    %c0_i32_1 = arith.constant 0 : i32
    %c0_i32_2 = arith.constant 0 : i32
    return %c0_i32, %c0_i32_0, %c0_i32_1 : i32, i32, i32
  }
  func.func @transform_5(%arg0: i32) -> (i32, i32, i32) {
    %c0_i32 = arith.constant 0 : i32
    %c0_i32_0 = arith.constant 0 : i32
    %c0_i32_1 = arith.constant 0 : i32
    %c0_i32_2 = arith.constant 0 : i32
    return %c0_i32, %c0_i32_0, %c0_i32_1 : i32, i32, i32
  }
  func.func @transform_6(%arg0: i32) -> (i32, i32, i32) {
    %c0_i32 = arith.constant 0 : i32
    %c0_i32_0 = arith.constant 0 : i32
    %c0_i32_1 = arith.constant 0 : i32
    %c0_i32_2 = arith.constant 0 : i32
    return %c0_i32, %c0_i32_0, %c0_i32_1 : i32, i32, i32
  }
  func.func @transform_7(%arg0: i32) -> (i32, i32, i32) {
    %c0_i32 = arith.constant 0 : i32
    %c0_i32_0 = arith.constant 0 : i32
    %c0_i32_1 = arith.constant 0 : i32
    %c0_i32_2 = arith.constant 0 : i32
    return %c0_i32, %c0_i32_0, %c0_i32_1 : i32, i32, i32
  }
  func.func @transform_8(%arg0: i32) -> (i32, i32) {
    %c0_i32 = arith.constant 0 : i32
    %c0_i32_0 = arith.constant 0 : i32
    %c0_i32_1 = arith.constant 0 : i32
    return %c0_i32, %c0_i32_0 : i32, i32
  }
  func.func @transform_9(%arg0: i32) -> (i32, i32) {
    %c0_i32 = arith.constant 0 : i32
    %c0_i32_0 = arith.constant 0 : i32
    %c0_i32_1 = arith.constant 0 : i32
    return %c0_i32, %c0_i32_0 : i32, i32
  }
  func.func @transform_10(%arg0: i32) -> (i32, i32) {
    %c0_i32 = arith.constant 0 : i32
    %c0_i32_0 = arith.constant 0 : i32
    %c0_i32_1 = arith.constant 0 : i32
    return %c0_i32, %c0_i32_0 : i32, i32
  }
}

</mosaic_0001>

<llo_original>
// kernel: eq.8
$region0: #{eq.8}
  %s0 = inlined_call_operand.vmem [shape: s32[2,8], index: 0, kind: input, shape index: {}]
  %s1 = inlined_call_operand.vmem [shape: s32[16], index: 1, kind: output, shape index: {}]
  $region1: #{eq.8} parent=0
    #allocation0 [shape = 'u8[4096]{0}', space=vmem, size = 0x1000, scoped, tag = 'scoped mem for output reshape']
    #allocation1 [shape = 'u8[4096]{0}', space=vmem, size = 0x1000, scoped, tag = 'scoped mem for input reshape']
    %s3 = sshllo.u32 0, 2
    %v4 = vld [vmem:[%s0] sm:%s3]
    %5 = vst [vmem:[#allocation1] sm:%s3] %v4
    %v6 = vld [vmem:[#allocation1] sm:$0x1]
    %vm7 = vcmask 64512
    %8 = vst.msk [vmem:[#allocation0] sm:$0x1] %vm7, %v6
    %s9 = scalar_lea.vmem [#allocation1], 1
    %v10 = vld [vmem:[%s9] sm:$0x1]
    %11 = vrot.lane.b32.xlu0 %v10, 8
    %v12 = vpop.permute.xlu0 %11
    %vm13 = vcmask 130112
    %14 = vst.msk [vmem:[#allocation0] sm:$0x1] %vm13, %v12
    %s16 = sshllo.u32 0, 1
    %v18 = vld [vmem:[#allocation0] sm:%s16]
    %s19 = sshllo.u32 0, 1
    %20 = vst [vmem:[%s1] sm:%s19] %v18

// kernel: forward.1
$region0: #{forward.1}
  #allocation0 [shape = 'u32[]', space=smem, size = 0x4, offset = 0x4, fixed_abs, tag = 'smem constant byte address 0x4 - core index']
  #allocation1 [shape = 'u32[144,128]{1,0:T(1,128)}', space=vmem, size = 0x12000, scoped, tag = 'internal scratch']
  %s0 = inlined_call_operand.vmem [shape: s32[16,1], index: 0, kind: input, shape index: {}]
  %s1 = inlined_call_operand.vmem [shape: f32[16,16], index: 1, kind: input, shape index: {}]
  %s2 = inlined_call_operand.vmem [shape: bf16[64,32], index: 2, kind: input, shape index: {}]
  %s3 = inlined_call_operand.vmem [shape: f32[16,32], index: 3, kind: input, shape index: {}]
  %s4 = inlined_call_operand.vmem [shape: bf16[2,32,96], index: 4, kind: input, shape index: {}]
  %s5 = inlined_call_operand.vmem [shape: bf16[2,32,32], index: 5, kind: input, shape index: {}]
  %s6 = inlined_call_operand.vmem [shape: bf16[2,32,128], index: 6, kind: input, shape index: {}]
  %s7 = inlined_call_operand.vmem [shape: bf16[2,128,32], index: 7, kind: input, shape index: {}]
  %s8 = inlined_call_operand.vmem [shape: bf16[32,128], index: 8, kind: input, shape index: {}]
  %s9 = inlined_call_operand.vmem [shape: f32[24,128], index: 9, kind: input, shape index: {}]
  %s10 = inlined_call_operand.vmem [shape: f32[16,128], index: 10, kind: output, shape index: {}]
  %s11 = sld [smem:[#allocation0]]
  $region50: #{forward.1} parent=0
    _
  %s13 = ssub.s32 1, %s11
  %s14 = scalar_select 0, %s13, %s11
  // Predicated region
  $region2: #{forward.1} parent=0 // pred_check
    _
  $region3: #{forward.1} parent=0 // pred_check_branch
    %16 = sbr.rel (0) target = $region5
  $region4: #{forward.1} parent=0 // pred_region
    _
  $region5: #{forward.1} parent=0 // pred_fallthru
    _
  // Predicated region
  $region6: #{forward.1} parent=0 // pred_check
    _
  $region7: #{forward.1} parent=0 // pred_check_branch
    %18 = sbr.rel (0) target = $region9
  $region8: #{forward.1} parent=0 // pred_region
    _
  $region9: #{forward.1} parent=0 // pred_fallthru
    _
  // Predicated region
  $region10: #{forward.1} parent=0 // pred_check
    _
  $region11: #{forward.1} parent=0 // pred_check_branch
    %20 = sbr.rel (0) target = $region13
  $region12: #{forward.1} parent=0 // pred_region
    _
  $region13: #{forward.1} parent=0 // pred_fallthru
    _
  // Predicated region
  $region14: #{forward.1} parent=0 // pred_check
    _
  $region15: #{forward.1} parent=0 // pred_check_branch
    %22 = sbr.rel (0) target = $region17
  $region16: #{forward.1} parent=0 // pred_region
    _
  $region17: #{forward.1} parent=0 // pred_fallthru
    _
  // Predicated region
  $region18: #{forward.1} parent=0 // pred_check
    _
  $region19: #{forward.1} parent=0 // pred_check_branch
    %24 = sbr.rel (0) target = $region21
  $region20: #{forward.1} parent=0 // pred_region
    _
  $region21: #{forward.1} parent=0 // pred_fallthru
    _
  // Predicated region
  $region22: #{forward.1} parent=0 // pred_check
    _
  $region23: #{forward.1} parent=0 // pred_check_branch
    %26 = sbr.rel (0) target = $region25
  $region24: #{forward.1} parent=0 // pred_region
    _
  $region25: #{forward.1} parent=0 // pred_fallthru
    _
  // Predicated region
  $region26: #{forward.1} parent=0 // pred_check
    _
  $region27: #{forward.1} parent=0 // pred_check_branch
    %28 = sbr.rel (0) target = $region29
  $region28: #{forward.1} parent=0 // pred_region
    _
  $region29: #{forward.1} parent=0 // pred_fallthru
    _
  // Predicated region
  $region30: #{forward.1} parent=0 // pred_check
    _
  $region31: #{forward.1} parent=0 // pred_check_branch
    %30 = sbr.rel (0) target = $region33
  $region32: #{forward.1} parent=0 // pred_region
    _
  $region33: #{forward.1} parent=0 // pred_fallthru
    _
  // Predicated region
  $region34: #{forward.1} parent=0 // pred_check
    _
  $region35: #{forward.1} parent=0 // pred_check_branch
    %32 = sbr.rel (0) target = $region37
  $region36: #{forward.1} parent=0 // pred_region
    _
  $region37: #{forward.1} parent=0 // pred_fallthru
    _
  // Predicated region
  $region38: #{forward.1} parent=0 // pred_check
    _
  $region39: #{forward.1} parent=0 // pred_check_branch
    %34 = sbr.rel (0) target = $region41
  $region40: #{forward.1} parent=0 // pred_region
    _
  $region41: #{forward.1} parent=0 // pred_fallthru
    _
  %v36 = vld [vmem:[%s0] sm:$0xff]
  %v37 = vld [vmem:[%s0 + $0x8] sm:$0xff]
  %v38 = vlaneseq
  %v39 = vand.u32 %v38, 127
  %40 = vset.pattern.permute.xlu0 0
  %41 = vperm.xlu0 %40, %v36
  %v42 = vpop.permute.xlu0 %41
  %43 = vset.pattern.permute.xlu0 0
  %44 = vperm.xlu0 %43, %v37
  %v45 = vpop.permute.xlu0 %44
  %vm46 = vcmp.eq.s32.totalorder %v42, %v39
  %vm47 = vcmp.eq.s32.totalorder %v45, %v39
  %v48 = vsel %vm46, 1, 0
  %v49 = vsel %vm47, 1, 0
  %v50 = vcvt.s32.f32 %v48
  %v51 = vcvt.s32.f32 %v49
  %v52 = vpack.c.bf16 %v51, %v50
  %v53 = vld [vmem:[%s2] sm:$0xf]
  %v54 = vld [vmem:[%s2 + $0x4] sm:$0xf]
  %v55 = vld [vmem:[%s2 + $0x8] sm:$0xf]
  %v56 = vld [vmem:[%s2 + $0xc] sm:$0xf]
  %v57 = vld [vmem:[%s2 + $0x10] sm:$0xf]
  %v58 = vld [vmem:[%s2 + $0x14] sm:$0xf]
  %v59 = vld [vmem:[%s2 + $0x18] sm:$0xf]
  %v60 = vld [vmem:[%s2 + $0x1c] sm:$0xf]
  %v61 = vld [vmem:[%s3] sm:$0xff]
  %v70 = vunpack.c.l.b16 %v53
  %v71 = vunpack.c.l.b16 %v54
  %v72 = vunpack.c.l.b16 %v55
  %v73 = vunpack.c.l.b16 %v56
  %v74 = vunpack.c.l.b16 %v57
  %v75 = vunpack.c.l.b16 %v58
  %v76 = vunpack.c.l.b16 %v59
  %v77 = vunpack.c.l.b16 %v60
  %v78 = vpack.c.b16 %v71, %v70
  %v79 = vpack.c.b16 %v73, %v72
  %v80 = vpack.c.b16 %v75, %v74
  %v81 = vpack.c.b16 %v77, %v76
  %vm86 = vcmask 523264
  %v88 = vsel %vm86, %v52, 0
  %90 = vmatprep.subr.bf16.mxu0 0
  %91 = vmatpush1.bf16.msra.mxu0 %v78
  %92 = vmatprep.subr.bf16.mxu0 0
  %93 = vmatpush1.bf16.msra.mxu0 %v79
  %94 = vmatprep.subr.bf16.mxu0 0
  %95 = vmatpush1.bf16.msra.mxu0 %v80
  %96 = vmatprep.subr.bf16.mxu0 0
  %97 = vmatpush1.bf16.msra.mxu0 %v81
  %98 = vmatprep.subr.bf16.mxu0 0
  %99 = vmatpush1.bf16.msra.mxu0 0
  %100 = vmatprep.subr.bf16.mxu0 0
  %101 = vmatpush1.bf16.msra.mxu0 0
  %102 = vmatprep.subr.bf16.mxu0 0
  %103 = vmatpush1.bf16.msra.mxu0 0
  %104 = vmatprep.subr.bf16.mxu0 0
  %105 = vmatpush1.bf16.msra.mxu0 0
  %106 = vmatprep.subr.bf16.mxu0 0
  %107 = vmatpush1.bf16.msra.mxu0 0
  %108 = vmatprep.subr.bf16.mxu0 0
  %109 = vmatpush1.bf16.msra.mxu0 0
  %110 = vmatprep.subr.bf16.mxu0 0
  %111 = vmatpush1.bf16.msra.mxu0 0
  %112 = vmatprep.subr.bf16.mxu0 0
  %113 = vmatpush1.bf16.msra.mxu0 0
  %114 = vmatprep.subr.bf16.mxu0 0
  %115 = vmatpush1.bf16.msra.mxu0 0
  %116 = vmatprep.subr.bf16.mxu0 0
  %117 = vmatpush1.bf16.msra.mxu0 0
  %118 = vmatprep.subr.bf16.mxu0 0
  %119 = vmatpush1.bf16.msra.mxu0 0
  %120 = vmatprep.subr.bf16.mxu0 0
  %121 = vmatpush1.bf16.msra.mxu0 0
  %122 = vmatprep.mubr.bf16.mxu0 0
  %123 = vmatmul.mubr.bf16.gmra.mrb[0].mxu0 %v88
  %v124 = vpop.f32.mrb[0].mxu0
  %v125 = vadd.f32 %v61, %v124
  %v126 = vpop.f32.mrb[0].mxu0
  %v127 = vpop.f32.mrb[0].mxu0
  %v128 = vadd.f32 %v61, %v127
  %v129 = vpop.f32.mrb[0].mxu0
  %130 = vdwg.mxu0
  %v131 = vld [vmem:[%s9] sm:$0x1]
  %v132 = vld [vmem:[%s9 + $0x1] sm:$0x1]
  %vm133 = vcmask 261120
  %v134 = vsel %vm133, %v125, 0.0
  %135 = vadd.xlane.f32.xlu0 %v134
  %v136 = vpop.xlane.xlu0 %135
  %v137 = vsel %vm133, %v128, 0.0
  %138 = vadd.xlane.f32.xlu0 %v137
  %v139 = vpop.xlane.xlu0 %138
  %v140 = vrcp.pop 32.0
  %v141 = vmul.f32 %v136, %v140
  %v142 = vmul.f32 %v139, %v140
  %v143 = vsub.f32 %v125, %v141
  %v144 = vsub.f32 %v128, %v142
  %v145 = vmul.f32 %v143, %v143
  %v146 = vmul.f32 %v144, %v144
  %v147 = vsel %vm133, %v145, 0.0
  %148 = vadd.xlane.f32.xlu0 %v147
  %v149 = vpop.xlane.xlu0 %148
  %v150 = vsel %vm133, %v146, 0.0
  %151 = vadd.xlane.f32.xlu0 %v150
  %v152 = vpop.xlane.xlu0 %151
  %v153 = vmul.f32 %v149, %v140
  %v154 = vmul.f32 %v152, %v140
  %v155 = vadd.f32 %v153, 1e-12
  %v156 = vadd.f32 %v154, 1e-12
  %v157 = vrsqrt.pop %v155
  %v158 = vrsqrt.pop %v156
  %v159 = vmul.f32 %v143, %v157
  %v160 = vmul.f32 %v144, %v158
  %v161 = vlaneseq
  %v162 = vshrl.u32 %v161, 7
  %v163 = vsub.s32 0, %v162
  %v164 = vrot.slane %v131, %v163
  %v165 = vmul.f32 %v159, %v164
  %v166 = vmul.f32 %v160, %v164
  %v167 = vlaneseq
  %v168 = vshrl.u32 %v167, 7
  %v169 = vsub.s32 0, %v168
  %v170 = vrot.slane %v132, %v169
  %v171 = vadd.f32 %v165, %v170
  %v172 = vadd.f32 %v166, %v170
  %v173 = vld [vmem:[%s1] sm:$0xff]
  %v174 = vld [vmem:[%s1 + $0x8] sm:$0xff]
  %vm175 = vcmp.ge.s32.totalorder %v39, 0
  %vm176 = vcmp.lt.s32.totalorder %v39, 8
  %vm177 = vmand %vm175, %vm176
  %v178 = vsel %vm177, 1, 0
  %v179 = vcvt.s32.f32 %v178
  %vm180 = vcmp.ge.s32.totalorder %v39, 8
  %vm181 = vcmp.lt.s32.totalorder %v39, 16
  %vm182 = vmand %vm180, %vm181
  %v183 = vsel %vm182, 1, 0
  %v184 = vcvt.s32.f32 %v183
  %vm185 = vcmp.ge.s32.totalorder %v39, 16
  %vm186 = vcmp.lt.s32.totalorder %v39, 24
  %vm187 = vmand %vm185, %vm186
  %v188 = vsel %vm187, 1, 0
  %v189 = vcvt.s32.f32 %v188
  %vm190 = vcmp.ge.s32.totalorder %v39, 24
  %vm191 = vcmp.lt.s32.totalorder %v39, 32
  %vm192 = vmand %vm190, %vm191
  %v193 = vsel %vm192, 1, 0
  %v194 = vcvt.s32.f32 %v193
  %v195 = vld [vmem:[%s4] sm:$0xf]
  %v196 = vld [vmem:[%s4 + $0x4] sm:$0xf]
  %v197 = vld [vmem:[%s4 + $0x8] sm:$0xf]
  %v198 = vld [vmem:[%s4 + $0xc] sm:$0xf]
  %v199 = vld [vmem:[%s9 + $0x2] sm:$0x1]
  %v200 = vpack.c.bf16 %v172, %v171
  %v201 = vlaneseq
  %v202 = vshrl.u32 %v201, 7
  %v203 = vsub.s32 0, %v202
  %v204 = vrot.slane %v199, %v203
  %v209 = vunpack.c.l.b16 %v195
  %v210 = vunpack.c.l.b16 %v196
  %v211 = vunpack.c.l.b16 %v197
  %v212 = vunpack.c.l.b16 %v198
  %v213 = vpack.c.b16 %v210, %v209
  %v214 = vpack.c.b16 %v212, %v211
  %v218 = vsel %vm133, %v200, 0
  %220 = vmatprep.subr.bf16.mxu0 0
  %221 = vmatpush1.bf16.msra.mxu0 %v213
  %222 = vmatprep.subr.bf16.mxu0 0
  %223 = vmatpush1.bf16.msra.mxu0 %v214
  %224 = vmatprep.subr.bf16.mxu0 0
  %225 = vmatpush1.bf16.msra.mxu0 0
  %226 = vmatprep.subr.bf16.mxu0 0
  %227 = vmatpush1.bf16.msra.mxu0 0
  %228 = vmatprep.subr.bf16.mxu0 0
  %229 = vmatpush1.bf16.msra.mxu0 0
  %230 = vmatprep.subr.bf16.mxu0 0
  %231 = vmatpush1.bf16.msra.mxu0 0
  %232 = vmatprep.subr.bf16.mxu0 0
  %233 = vmatpush1.bf16.msra.mxu0 0
  %234 = vmatprep.subr.bf16.mxu0 0
  %235 = vmatpush1.bf16.msra.mxu0 0
  %236 = vmatprep.subr.bf16.mxu0 0
  %237 = vmatpush1.bf16.msra.mxu0 0
  %238 = vmatprep.subr.bf16.mxu0 0
  %239 = vmatpush1.bf16.msra.mxu0 0
  %240 = vmatprep.subr.bf16.mxu0 0
  %241 = vmatpush1.bf16.msra.mxu0 0
  %242 = vmatprep.subr.bf16.mxu0 0
  %243 = vmatpush1.bf16.msra.mxu0 0
  %244 = vmatprep.subr.bf16.mxu0 0
  %245 = vmatpush1.bf16.msra.mxu0 0
  %246 = vmatprep.subr.bf16.mxu0 0
  %247 = vmatpush1.bf16.msra.mxu0 0
  %248 = vmatprep.subr.bf16.mxu0 0
  %249 = vmatpush1.bf16.msra.mxu0 0
  %250 = vmatprep.subr.bf16.mxu0 0
  %251 = vmatpush1.bf16.msra.mxu0 0
  %252 = vmatprep.mubr.bf16.mxu0 0
  %253 = vmatmul.mubr.bf16.gmra.mrb[0].mxu0 %v218
  %v254 = vpop.f32.mrb[0].mxu0
  %v255 = vadd.f32 %v204, %v254
  %v256 = vpop.f32.mrb[0].mxu0
  %v257 = vpop.f32.mrb[0].mxu0
  %v258 = vadd.f32 %v204, %v257
  %v259 = vpop.f32.mrb[0].mxu0
  %260 = vdwg.mxu0
  %v261 = vpack.c.bf16 %v258, %v255
  %v262 = vmul.f32 %v255, %v179
  %v263 = vmul.f32 %v258, %v179
  %v264 = vpack.c.bf16 %v263, %v262
  %266 = vrot.lane.b32.xlu0 %v261, 96
  %v267 = vpop.permute.xlu0 %266
  %v269 = vsel %vm133, %v264, 0
  %v272 = vsel %vm133, %v267, 0
  %274 = vmatprep.subr.bf16.mxu0 0
  %275 = vmatpush1.bf16.xpose.msra.mxu0 %v272
  %276 = vmatprep.subr.bf16.mxu0 0
  %277 = vmatpush1.bf16.xpose.msra.mxu0 0
  %278 = vmatprep.subr.bf16.mxu0 0
  %279 = vmatpush1.bf16.xpose.msra.mxu0 0
  %280 = vmatprep.subr.bf16.mxu0 0
  %281 = vmatpush1.bf16.xpose.msra.mxu0 0
  %282 = vmatprep.subr.bf16.mxu0 0
  %283 = vmatpush1.bf16.xpose.msra.mxu0 0
  %284 = vmatprep.subr.bf16.mxu0 0
  %285 = vmatpush1.bf16.xpose.msra.mxu0 0
  %286 = vmatprep.subr.bf16.mxu0 0
  %287 = vmatpush1.bf16.xpose.msra.mxu0 0
  %288 = vmatprep.subr.bf16.mxu0 0
  %289 = vmatpush1.bf16.xpose.msra.mxu0 0
  %290 = vmatprep.subr.bf16.mxu0 0
  %291 = vmatpush1.bf16.xpose.msra.mxu0 0
  %292 = vmatprep.subr.bf16.mxu0 0
  %293 = vmatpush1.bf16.xpose.msra.mxu0 0
  %294 = vmatprep.subr.bf16.mxu0 0
  %295 = vmatpush1.bf16.xpose.msra.mxu0 0
  %296 = vmatprep.subr.bf16.mxu0 0
  %297 = vmatpush1.bf16.xpose.msra.mxu0 0
  %298 = vmatprep.subr.bf16.mxu0 0
  %299 = vmatpush1.bf16.xpose.msra.mxu0 0
  %300 = vmatprep.subr.bf16.mxu0 0
  %301 = vmatpush1.bf16.xpose.msra.mxu0 0
  %302 = vmatprep.subr.bf16.mxu0 0
  %303 = vmatpush1.bf16.xpose.msra.mxu0 0
  %304 = vmatprep.subr.bf16.mxu0 0
  %305 = vmatpush1.bf16.xpose.msra.mxu0 0
  %306 = vmatprep.mubr.bf16.mxu0 0
  %307 = vmatmul.mubr.bf16.gmra.mrb[0].mxu0 %v269
  %v308 = vpop.f32.mrb[0].mxu0
  %v309 = vadd.f32 %v173, %v308
  %v310 = vpop.f32.mrb[0].mxu0
  %v311 = vpop.f32.mrb[0].mxu0
  %v312 = vadd.f32 %v174, %v311
  %v313 = vpop.f32.mrb[0].mxu0
  %314 = vdwg.mxu0
  %vm315 = vcmask 130048
  %v316 = vsel %vm315, %v309, -inf
  %317 = vmax.xlane.f32.xlu0 %v316
  %v318 = vpop.xlane.xlu0 %317
  %v319 = vsel %vm315, %v312, -inf
  %320 = vmax.xlane.f32.xlu0 %v319
  %v321 = vpop.xlane.xlu0 %320
  %v322 = vsub.f32 %v309, %v318
  %v323 = vsub.f32 %v312, %v321
  %v324 = vmul.f32 %v322, 1.442695
  %v325 = vpow.pop %v324
  %v326 = vmul.f32 %v323, 1.442695
  %v327 = vpow.pop %v326
  %v328 = vsel %vm315, %v325, 0.0
  %329 = vadd.xlane.f32.xlu0 %v328
  %v330 = vpop.xlane.xlu0 %329
  %v331 = vsel %vm315, %v327, 0.0
  %332 = vadd.xlane.f32.xlu0 %v331
  %v333 = vpop.xlane.xlu0 %332
  %v334 = vrcp.pop %v330
  %v335 = vrcp.pop %v333
  %v336 = vmul.f32 %v325, %v334
  %v337 = vmul.f32 %v327, %v335
  %v338 = vpack.c.bf16 %v337, %v336
  %339 = vrot.lane.b32.xlu0 %v261, 64
  %v340 = vpop.permute.xlu0 %339
  %v343 = vsel %vm315, %v338, 0
  %345 = vmatprep.subr.bf16.mxu0 0
  %346 = vmatpush1.bf16.msra.mxu0 %v340
  %347 = vmatprep.subr.bf16.mxu0 0
  %348 = vmatpush1.bf16.msra.mxu0 0
  %349 = vmatprep.subr.bf16.mxu0 0
  %350 = vmatpush1.bf16.msra.mxu0 0
  %351 = vmatprep.subr.bf16.mxu0 0
  %352 = vmatpush1.bf16.msra.mxu0 0
  %353 = vmatprep.subr.bf16.mxu0 0
  %354 = vmatpush1.bf16.msra.mxu0 0
  %355 = vmatprep.subr.bf16.mxu0 0
  %356 = vmatpush1.bf16.msra.mxu0 0
  %357 = vmatprep.subr.bf16.mxu0 0
  %358 = vmatpush1.bf16.msra.mxu0 0
  %359 = vmatprep.subr.bf16.mxu0 0
  %360 = vmatpush1.bf16.msra.mxu0 0
  %361 = vmatprep.subr.bf16.mxu0 0
  %362 = vmatpush1.bf16.msra.mxu0 0
  %363 = vmatprep.subr.bf16.mxu0 0
  %364 = vmatpush1.bf16.msra.mxu0 0
  %365 = vmatprep.subr.bf16.mxu0 0
  %366 = vmatpush1.bf16.msra.mxu0 0
  %367 = vmatprep.subr.bf16.mxu0 0
  %368 = vmatpush1.bf16.msra.mxu0 0
  %369 = vmatprep.subr.bf16.mxu0 0
  %370 = vmatpush1.bf16.msra.mxu0 0
  %371 = vmatprep.subr.bf16.mxu0 0
  %372 = vmatpush1.bf16.msra.mxu0 0
  %373 = vmatprep.subr.bf16.mxu0 0
  %374 = vmatpush1.bf16.msra.mxu0 0
  %375 = vmatprep.subr.bf16.mxu0 0
  %376 = vmatpush1.bf16.msra.mxu0 0
  %377 = vmatprep.mubr.bf16.mxu0 0
  %378 = vmatmul.mubr.bf16.gmra.mrb[0].mxu0 %v343
  %v379 = vpop.f32.mrb[0].mxu0
  %v380 = vadd.f32 0.0, %v379
  %v381 = vpop.f32.mrb[0].mxu0
  %v382 = vpop.f32.mrb[0].mxu0
  %v383 = vadd.f32 0.0, %v382
  %v384 = vpop.f32.mrb[0].mxu0
  %385 = vdwg.mxu0
  %v386 = vmul.f32 %v179, %v380
  %v387 = vmul.f32 %v179, %v383
  %v388 = vadd.f32 %v386, 0.0
  %v389 = vadd.f32 %v387, 0.0
  %v390 = vmul.f32 %v255, %v184
  %v391 = vmul.f32 %v258, %v184
  %v392 = vpack.c.bf16 %v391, %v390
  %v394 = vsel %vm133, %v392, 0
  %396 = vmatprep.subr.bf16.mxu0 0
  %397 = vmatpush1.bf16.xpose.msra.mxu0 %v272
  %398 = vmatprep.subr.bf16.mxu0 0
  %399 = vmatpush1.bf16.xpose.msra.mxu0 0
  %400 = vmatprep.subr.bf16.mxu0 0
  %401 = vmatpush1.bf16.xpose.msra.mxu0 0
  %402 = vmatprep.subr.bf16.mxu0 0
  %403 = vmatpush1.bf16.xpose.msra.mxu0 0
  %404 = vmatprep.subr.bf16.mxu0 0
  %405 = vmatpush1.bf16.xpose.msra.mxu0 0
  %406 = vmatprep.subr.bf16.mxu0 0
  %407 = vmatpush1.bf16.xpose.msra.mxu0 0
  %408 = vmatprep.subr.bf16.mxu0 0
  %409 = vmatpush1.bf16.xpose.msra.mxu0 0
  %410 = vmatprep.subr.bf16.mxu0 0
  %411 = vmatpush1.bf16.xpose.msra.mxu0 0
  %412 = vmatprep.subr.bf16.mxu0 0
  %413 = vmatpush1.bf16.xpose.msra.mxu0 0
  %414 = vmatprep.subr.bf16.mxu0 0
  %415 = vmatpush1.bf16.xpose.msra.mxu0 0
  %416 = vmatprep.subr.bf16.mxu0 0
  %417 = vmatpush1.bf16.xpose.msra.mxu0 0
  %418 = vmatprep.subr.bf16.mxu0 0
  %419 = vmatpush1.bf16.xpose.msra.mxu0 0
  %420 = vmatprep.subr.bf16.mxu0 0
  %421 = vmatpush1.bf16.xpose.msra.mxu0 0
  %422 = vmatprep.subr.bf16.mxu0 0
  %423 = vmatpush1.bf16.xpose.msra.mxu0 0
  %424 = vmatprep.subr.bf16.mxu0 0
  %425 = vmatpush1.bf16.xpose.msra.mxu0 0
  %426 = vmatprep.subr.bf16.mxu0 0
  %427 = vmatpush1.bf16.xpose.msra.mxu0 0
  %428 = vmatprep.mubr.bf16.mxu0 0
  %429 = vmatmul.mubr.bf16.gmra.mrb[0].mxu0 %v394
  %v430 = vpop.f32.mrb[0].mxu0
  %v431 = vadd.f32 %v173, %v430
  %v432 = vpop.f32.mrb[0].mxu0
  %v433 = vpop.f32.mrb[0].mxu0
  %v434 = vadd.f32 %v174, %v433
  %v435 = vpop.f32.mrb[0].mxu0
  %436 = vdwg.mxu0
  %v437 = vsel %vm315, %v431, -inf
  %438 = vmax.xlane.f32.xlu0 %v437
  %v439 = vpop.xlane.xlu0 %438
  %v440 = vsel %vm315, %v434, -inf
  %441 = vmax.xlane.f32.xlu0 %v440
  %v442 = vpop.xlane.xlu0 %441
  %v443 = vsub.f32 %v431, %v439
  %v444 = vsub.f32 %v434, %v442
  %v445 = vmul.f32 %v443, 1.442695
  %v446 = vpow.pop %v445
  %v447 = vmul.f32 %v444, 1.442695
  %v448 = vpow.pop %v447
  %v449 = vsel %vm315, %v446, 0.0
  %450 = vadd.xlane.f32.xlu0 %v449
  %v451 = vpop.xlane.xlu0 %450
  %v452 = vsel %vm315, %v448, 0.0
  %453 = vadd.xlane.f32.xlu0 %v452
  %v454 = vpop.xlane.xlu0 %453
  %v455 = vrcp.pop %v451
  %v456 = vrcp.pop %v454
  %v457 = vmul.f32 %v446, %v455
  %v458 = vmul.f32 %v448, %v456
  %v459 = vpack.c.bf16 %v458, %v457
  %v461 = vsel %vm315, %v459, 0
  %463 = vmatprep.subr.bf16.mxu0 0
  %464 = vmatpush1.bf16.msra.mxu0 %v340
  %465 = vmatprep.subr.bf16.mxu0 0
  %466 = vmatpush1.bf16.msra.mxu0 0
  %467 = vmatprep.subr.bf16.mxu0 0
  %468 = vmatpush1.bf16.msra.mxu0 0
  %469 = vmatprep.subr.bf16.mxu0 0
  %470 = vmatpush1.bf16.msra.mxu0 0
  %471 = vmatprep.subr.bf16.mxu0 0
  %472 = vmatpush1.bf16.msra.mxu0 0
  %473 = vmatprep.subr.bf16.mxu0 0
  %474 = vmatpush1.bf16.msra.mxu0 0
  %475 = vmatprep.subr.bf16.mxu0 0
  %476 = vmatpush1.bf16.msra.mxu0 0
  %477 = vmatprep.subr.bf16.mxu0 0
  %478 = vmatpush1.bf16.msra.mxu0 0
  %479 = vmatprep.subr.bf16.mxu0 0
  %480 = vmatpush1.bf16.msra.mxu0 0
  %481 = vmatprep.subr.bf16.mxu0 0
  %482 = vmatpush1.bf16.msra.mxu0 0
  %483 = vmatprep.subr.bf16.mxu0 0
  %484 = vmatpush1.bf16.msra.mxu0 0
  %485 = vmatprep.subr.bf16.mxu0 0
  %486 = vmatpush1.bf16.msra.mxu0 0
  %487 = vmatprep.subr.bf16.mxu0 0
  %488 = vmatpush1.bf16.msra.mxu0 0
  %489 = vmatprep.subr.bf16.mxu0 0
  %490 = vmatpush1.bf16.msra.mxu0 0
  %491 = vmatprep.subr.bf16.mxu0 0
  %492 = vmatpush1.bf16.msra.mxu0 0
  %493 = vmatprep.subr.bf16.mxu0 0
  %494 = vmatpush1.bf16.msra.mxu0 0
  %495 = vmatprep.mubr.bf16.mxu0 0
  %496 = vmatmul.mubr.bf16.gmra.mrb[0].mxu0 %v461
  %v497 = vpop.f32.mrb[0].mxu0
  %v498 = vadd.f32 0.0, %v497
  %v499 = vpop.f32.mrb[0].mxu0
  %v500 = vpop.f32.mrb[0].mxu0
  %v501 = vadd.f32 0.0, %v500
  %v502 = vpop.f32.mrb[0].mxu0
  %503 = vdwg.mxu0
  %v504 = vmul.f32 %v184, %v498
  %v505 = vmul.f32 %v184, %v501
  %v506 = vadd.f32 %v388, %v504
  %v507 = vadd.f32 %v389, %v505
  %v508 = vmul.f32 %v255, %v189
  %v509 = vmul.f32 %v258, %v189
  %v510 = vpack.c.bf16 %v509, %v508
  %v512 = vsel %vm133, %v510, 0
  %514 = vmatprep.subr.bf16.mxu0 0
  %515 = vmatpush1.bf16.xpose.msra.mxu0 %v272
  %516 = vmatprep.subr.bf16.mxu0 0
  %517 = vmatpush1.bf16.xpose.msra.mxu0 0
  %518 = vmatprep.subr.bf16.mxu0 0
  %519 = vmatpush1.bf16.xpose.msra.mxu0 0
  %520 = vmatprep.subr.bf16.mxu0 0
  %521 = vmatpush1.bf16.xpose.msra.mxu0 0
  %522 = vmatprep.subr.bf16.mxu0 0
  %523 = vmatpush1.bf16.xpose.msra.mxu0 0
  %524 = vmatprep.subr.bf16.mxu0 0
  %525 = vmatpush1.bf16.xpose.msra.mxu0 0
  %526 = vmatprep.subr.bf16.mxu0 0
  %527 = vmatpush1.bf16.xpose.msra.mxu0 0
  %528 = vmatprep.subr.bf16.mxu0 0
  %529 = vmatpush1.bf16.xpose.msra.mxu0 0
  %530 = vmatprep.subr.bf16.mxu0 0
  %531 = vmatpush1.bf16.xpose.msra.mxu0 0
  %532 = vmatprep.subr.bf16.mxu0 0
  %533 = vmatpush1.bf16.xpose.msra.mxu0 0
  %534 = vmatprep.subr.bf16.mxu0 0
  %535 = vmatpush1.bf16.xpose.msra.mxu0 0
  %536 = vmatprep.subr.bf16.mxu0 0
  %537 = vmatpush1.bf16.xpose.msra.mxu0 0
  %538 = vmatprep.subr.bf16.mxu0 0
  %539 = vmatpush1.bf16.xpose.msra.mxu0 0
  %540 = vmatprep.subr.bf16.mxu0 0
  %541 = vmatpush1.bf16.xpose.msra.mxu0 0
  %542 = vmatprep.subr.bf16.mxu0 0
  %543 = vmatpush1.bf16.xpose.msra.mxu0 0
  %544 = vmatprep.subr.bf16.mxu0 0
  %545 = vmatpush1.bf16.xpose.msra.mxu0 0
  %546 = vmatprep.mubr.bf16.mxu0 0
  %547 = vmatmul.mubr.bf16.gmra.mrb[0].mxu0 %v512
  %v548 = vpop.f32.mrb[0].mxu0
  %v549 = vadd.f32 %v173, %v548
  %v550 = vpop.f32.mrb[0].mxu0
  %v551 = vpop.f32.mrb[0].mxu0
  %v552 = vadd.f32 %v174, %v551
  %v553 = vpop.f32.mrb[0].mxu0
  %554 = vdwg.mxu0
  %v555 = vsel %vm315, %v549, -inf
  %556 = vmax.xlane.f32.xlu0 %v555
  %v557 = vpop.xlane.xlu0 %556
  %v558 = vsel %vm315, %v552, -inf
  %559 = vmax.xlane.f32.xlu0 %v558
  %v560 = vpop.xlane.xlu0 %559
  %v561 = vsub.f32 %v549, %v557
  %v562 = vsub.f32 %v552, %v560
  %v563 = vmul.f32 %v561, 1.442695
  %v564 = vpow.pop %v563
  %v565 = vmul.f32 %v562, 1.442695
  %v566 = vpow.pop %v565
  %v567 = vsel %vm315, %v564, 0.0
  %568 = vadd.xlane.f32.xlu0 %v567
  %v569 = vpop.xlane.xlu0 %568
  %v570 = vsel %vm315, %v566, 0.0
  %571 = vadd.xlane.f32.xlu0 %v570
  %v572 = vpop.xlane.xlu0 %571
  %v573 = vrcp.pop %v569
  %v574 = vrcp.pop %v572
  %v575 = vmul.f32 %v564, %v573
  %v576 = vmul.f32 %v566, %v574
  %v577 = vpack.c.bf16 %v576, %v575
  %v579 = vsel %vm315, %v577, 0
  %581 = vmatprep.subr.bf16.mxu0 0
  %582 = vmatpush1.bf16.msra.mxu0 %v340
  %583 = vmatprep.subr.bf16.mxu0 0
  %584 = vmatpush1.bf16.msra.mxu0 0
  %585 = vmatprep.subr.bf16.mxu0 0
  %586 = vmatpush1.bf16.msra.mxu0 0
  %587 = vmatprep.subr.bf16.mxu0 0
  %588 = vmatpush1.bf16.msra.mxu0 0
  %589 = vmatprep.subr.bf16.mxu0 0
  %590 = vmatpush1.bf16.msra.mxu0 0
  %591 = vmatprep.subr.bf16.mxu0 0
  %592 = vmatpush1.bf16.msra.mxu0 0
  %593 = vmatprep.subr.bf16.mxu0 0
  %594 = vmatpush1.bf16.msra.mxu0 0
  %595 = vmatprep.subr.bf16.mxu0 0
  %596 = vmatpush1.bf16.msra.mxu0 0
  %597 = vmatprep.subr.bf16.mxu0 0
  %598 = vmatpush1.bf16.msra.mxu0 0
  %599 = vmatprep.subr.bf16.mxu0 0
  %600 = vmatpush1.bf16.msra.mxu0 0
  %601 = vmatprep.subr.bf16.mxu0 0
  %602 = vmatpush1.bf16.msra.mxu0 0
  %603 = vmatprep.subr.bf16.mxu0 0
  %604 = vmatpush1.bf16.msra.mxu0 0
  %605 = vmatprep.subr.bf16.mxu0 0
  %606 = vmatpush1.bf16.msra.mxu0 0
  %607 = vmatprep.subr.bf16.mxu0 0
  %608 = vmatpush1.bf16.msra.mxu0 0
  %609 = vmatprep.subr.bf16.mxu0 0
  %610 = vmatpush1.bf16.msra.mxu0 0
  %611 = vmatprep.subr.bf16.mxu0 0
  %612 = vmatpush1.bf16.msra.mxu0 0
  %613 = vmatprep.mubr.bf16.mxu0 0
  %614 = vmatmul.mubr.bf16.gmra.mrb[0].mxu0 %v579
  %v615 = vpop.f32.mrb[0].mxu0
  %v616 = vadd.f32 0.0, %v615
  %v617 = vpop.f32.mrb[0].mxu0
  %v618 = vpop.f32.mrb[0].mxu0
  %v619 = vadd.f32 0.0, %v618
  %v620 = vpop.f32.mrb[0].mxu0
  %621 = vdwg.mxu0
  %v622 = vmul.f32 %v189, %v616
  %v623 = vmul.f32 %v189, %v619
  %v624 = vadd.f32 %v506, %v622
  %v625 = vadd.f32 %v507, %v623
  %v626 = vmul.f32 %v255, %v194
  %v627 = vmul.f32 %v258, %v194
  %v628 = vpack.c.bf16 %v627, %v626
  %v630 = vsel %vm133, %v628, 0
  %632 = vmatprep.subr.bf16.mxu0 0
  %633 = vmatpush1.bf16.xpose.msra.mxu0 %v272
  %634 = vmatprep.subr.bf16.mxu0 0
  %635 = vmatpush1.bf16.xpose.msra.mxu0 0
  %636 = vmatprep.subr.bf16.mxu0 0
  %637 = vmatpush1.bf16.xpose.msra.mxu0 0
  %638 = vmatprep.subr.bf16.mxu0 0
  %639 = vmatpush1.bf16.xpose.msra.mxu0 0
  %640 = vmatprep.subr.bf16.mxu0 0
  %641 = vmatpush1.bf16.xpose.msra.mxu0 0
  %642 = vmatprep.subr.bf16.mxu0 0
  %643 = vmatpush1.bf16.xpose.msra.mxu0 0
  %644 = vmatprep.subr.bf16.mxu0 0
  %645 = vmatpush1.bf16.xpose.msra.mxu0 0
  %646 = vmatprep.subr.bf16.mxu0 0
  %647 = vmatpush1.bf16.xpose.msra.mxu0 0
  %648 = vmatprep.subr.bf16.mxu0 0
  %649 = vmatpush1.bf16.xpose.msra.mxu0 0
  %650 = vmatprep.subr.bf16.mxu0 0
  %651 = vmatpush1.bf16.xpose.msra.mxu0 0
  %652 = vmatprep.subr.bf16.mxu0 0
  %653 = vmatpush1.bf16.xpose.msra.mxu0 0
  %654 = vmatprep.subr.bf16.mxu0 0
  %655 = vmatpush1.bf16.xpose.msra.mxu0 0
  %656 = vmatprep.subr.bf16.mxu0 0
  %657 = vmatpush1.bf16.xpose.msra.mxu0 0
  %658 = vmatprep.subr.bf16.mxu0 0
  %659 = vmatpush1.bf16.xpose.msra.mxu0 0
  %660 = vmatprep.subr.bf16.mxu0 0
  %661 = vmatpush1.bf16.xpose.msra.mxu0 0
  %662 = vmatprep.subr.bf16.mxu0 0
  %663 = vmatpush1.bf16.xpose.msra.mxu0 0
  %664 = vmatprep.mubr.bf16.mxu0 0
  %665 = vmatmul.mubr.bf16.gmra.mrb[0].mxu0 %v630
  %v666 = vpop.f32.mrb[0].mxu0
  %v667 = vadd.f32 %v173, %v666
  %v668 = vpop.f32.mrb[0].mxu0
  %v669 = vpop.f32.mrb[0].mxu0
  %v670 = vadd.f32 %v174, %v669
  %v671 = vpop.f32.mrb[0].mxu0
  %672 = vdwg.mxu0
  %v673 = vsel %vm315, %v667, -inf
  %674 = vmax.xlane.f32.xlu0 %v673
  %v675 = vpop.xlane.xlu0 %674
  %v676 = vsel %vm315, %v670, -inf
  %677 = vmax.xlane.f32.xlu0 %v676
  %v678 = vpop.xlane.xlu0 %677
  %v679 = vsub.f32 %v667, %v675
  %v680 = vsub.f32 %v670, %v678
  %v681 = vmul.f32 %v679, 1.442695
  %v682 = vpow.pop %v681
  %v683 = vmul.f32 %v680, 1.442695
  %v684 = vpow.pop %v683
  %v685 = vsel %vm315, %v682, 0.0
  %686 = vadd.xlane.f32.xlu0 %v685
  %v687 = vpop.xlane.xlu0 %686
  %v688 = vsel %vm315, %v684, 0.0
  %689 = vadd.xlane.f32.xlu0 %v688
  %v690 = vpop.xlane.xlu0 %689
  %v691 = vrcp.pop %v687
  %v692 = vrcp.pop %v690
  %v693 = vmul.f32 %v682, %v691
  %v694 = vmul.f32 %v684, %v692
  %v695 = vpack.c.bf16 %v694, %v693
  %v697 = vsel %vm315, %v695, 0
  %699 = vmatprep.subr.bf16.mxu0 0
  %700 = vmatpush1.bf16.msra.mxu0 %v340
  %701 = vmatprep.subr.bf16.mxu0 0
  %702 = vmatpush1.bf16.msra.mxu0 0
  %703 = vmatprep.subr.bf16.mxu0 0
  %704 = vmatpush1.bf16.msra.mxu0 0
  %705 = vmatprep.subr.bf16.mxu0 0
  %706 = vmatpush1.bf16.msra.mxu0 0
  %707 = vmatprep.subr.bf16.mxu0 0
  %708 = vmatpush1.bf16.msra.mxu0 0
  %709 = vmatprep.subr.bf16.mxu0 0
  %710 = vmatpush1.bf16.msra.mxu0 0
  %711 = vmatprep.subr.bf16.mxu0 0
  %712 = vmatpush1.bf16.msra.mxu0 0
  %713 = vmatprep.subr.bf16.mxu0 0
  %714 = vmatpush1.bf16.msra.mxu0 0
  %715 = vmatprep.subr.bf16.mxu0 0
  %716 = vmatpush1.bf16.msra.mxu0 0
  %717 = vmatprep.subr.bf16.mxu0 0
  %718 = vmatpush1.bf16.msra.mxu0 0
  %719 = vmatprep.subr.bf16.mxu0 0
  %720 = vmatpush1.bf16.msra.mxu0 0
  %721 = vmatprep.subr.bf16.mxu0 0
  %722 = vmatpush1.bf16.msra.mxu0 0
  %723 = vmatprep.subr.bf16.mxu0 0
  %724 = vmatpush1.bf16.msra.mxu0 0
  %725 = vmatprep.subr.bf16.mxu0 0
  %726 = vmatpush1.bf16.msra.mxu0 0
  %727 = vmatprep.subr.bf16.mxu0 0
  %728 = vmatpush1.bf16.msra.mxu0 0
  %729 = vmatprep.subr.bf16.mxu0 0
  %730 = vmatpush1.bf16.msra.mxu0 0
  %731 = vmatprep.mubr.bf16.mxu0 0
  %732 = vmatmul.mubr.bf16.gmra.mrb[0].mxu0 %v697
  %v733 = vpop.f32.mrb[0].mxu0
  %v734 = vadd.f32 0.0, %v733
  %v735 = vpop.f32.mrb[0].mxu0
  %v736 = vpop.f32.mrb[0].mxu0
  %v737 = vadd.f32 0.0, %v736
  %v738 = vpop.f32.mrb[0].mxu0
  %739 = vdwg.mxu0
  %v740 = vmul.f32 %v194, %v734
  %v741 = vmul.f32 %v194, %v737
  %v742 = vadd.f32 %v624, %v740
  %v743 = vadd.f32 %v625, %v741
  %v744 = vld [vmem:[%s5] sm:$0xf]
  %v745 = vld [vmem:[%s5 + $0x4] sm:$0xf]
  %v746 = vld [vmem:[%s5 + $0x8] sm:$0xf]
  %v747 = vld [vmem:[%s5 + $0xc] sm:$0xf]
  %v748 = vld [vmem:[%s9 + $0x3] sm:$0x1]
  %v749 = vpack.c.bf16 %v743, %v742
  %v750 = vlaneseq
  %v751 = vshrl.u32 %v750, 7
  %v752 = vsub.s32 0, %v751
  %v753 = vrot.slane %v748, %v752
  %v758 = vunpack.c.l.b16 %v744
  %v759 = vunpack.c.l.b16 %v745
  %v760 = vunpack.c.l.b16 %v746
  %v761 = vunpack.c.l.b16 %v747
  %v762 = vpack.c.b16 %v759, %v758
  %v763 = vpack.c.b16 %v761, %v760
  %v767 = vsel %vm133, %v749, 0
  %769 = vmatprep.subr.bf16.mxu0 0
  %770 = vmatpush1.bf16.msra.mxu0 %v762
  %771 = vmatprep.subr.bf16.mxu0 0
  %772 = vmatpush1.bf16.msra.mxu0 %v763
  %773 = vmatprep.subr.bf16.mxu0 0
  %774 = vmatpush1.bf16.msra.mxu0 0
  %775 = vmatprep.subr.bf16.mxu0 0
  %776 = vmatpush1.bf16.msra.mxu0 0
  %777 = vmatprep.subr.bf16.mxu0 0
  %778 = vmatpush1.bf16.msra.mxu0 0
  %779 = vmatprep.subr.bf16.mxu0 0
  %780 = vmatpush1.bf16.msra.mxu0 0
  %781 = vmatprep.subr.bf16.mxu0 0
  %782 = vmatpush1.bf16.msra.mxu0 0
  %783 = vmatprep.subr.bf16.mxu0 0
  %784 = vmatpush1.bf16.msra.mxu0 0
  %785 = vmatprep.subr.bf16.mxu0 0
  %786 = vmatpush1.bf16.msra.mxu0 0
  %787 = vmatprep.subr.bf16.mxu0 0
  %788 = vmatpush1.bf16.msra.mxu0 0
  %789 = vmatprep.subr.bf16.mxu0 0
  %790 = vmatpush1.bf16.msra.mxu0 0
  %791 = vmatprep.subr.bf16.mxu0 0
  %792 = vmatpush1.bf16.msra.mxu0 0
  %793 = vmatprep.subr.bf16.mxu0 0
  %794 = vmatpush1.bf16.msra.mxu0 0
  %795 = vmatprep.subr.bf16.mxu0 0
  %796 = vmatpush1.bf16.msra.mxu0 0
  %797 = vmatprep.subr.bf16.mxu0 0
  %798 = vmatpush1.bf16.msra.mxu0 0
  %799 = vmatprep.subr.bf16.mxu0 0
  %800 = vmatpush1.bf16.msra.mxu0 0
  %801 = vmatprep.mubr.bf16.mxu0 0
  %802 = vmatmul.mubr.bf16.gmra.mrb[0].mxu0 %v767
  %v803 = vpop.f32.mrb[0].mxu0
  %v804 = vadd.f32 %v753, %v803
  %v805 = vpop.f32.mrb[0].mxu0
  %v806 = vpop.f32.mrb[0].mxu0
  %v807 = vadd.f32 %v753, %v806
  %v808 = vpop.f32.mrb[0].mxu0
  %809 = vdwg.mxu0
  %v810 = vadd.f32 %v804, %v171
  %v811 = vadd.f32 %v807, %v172
  %v812 = vld [vmem:[%s9 + $0x4] sm:$0x1]
  %v813 = vld [vmem:[%s9 + $0x5] sm:$0x1]
  %v814 = vsel %vm133, %v810, 0.0
  %815 = vadd.xlane.f32.xlu0 %v814
  %v816 = vpop.xlane.xlu0 %815
  %v817 = vsel %vm133, %v811, 0.0
  %818 = vadd.xlane.f32.xlu0 %v817
  %v819 = vpop.xlane.xlu0 %818
  %v820 = vmul.f32 %v816, %v140
  %v821 = vmul.f32 %v819, %v140
  %v822 = vsub.f32 %v810, %v820
  %v823 = vsub.f32 %v811, %v821
  %v824 = vmul.f32 %v822, %v822
  %v825 = vmul.f32 %v823, %v823
  %v826 = vsel %vm133, %v824, 0.0
  %827 = vadd.xlane.f32.xlu0 %v826
  %v828 = vpop.xlane.xlu0 %827
  %v829 = vsel %vm133, %v825, 0.0
  %830 = vadd.xlane.f32.xlu0 %v829
  %v831 = vpop.xlane.xlu0 %830
  %v832 = vmul.f32 %v828, %v140
  %v833 = vmul.f32 %v831, %v140
  %v834 = vadd.f32 %v832, 1e-12
  %v835 = vadd.f32 %v833, 1e-12
  %v836 = vrsqrt.pop %v834
  %v837 = vrsqrt.pop %v835
  %v838 = vmul.f32 %v822, %v836
  %v839 = vmul.f32 %v823, %v837
  %v840 = vlaneseq
  %v841 = vshrl.u32 %v840, 7
  %v842 = vsub.s32 0, %v841
  %v843 = vrot.slane %v812, %v842
  %v844 = vmul.f32 %v838, %v843
  %v845 = vmul.f32 %v839, %v843
  %v846 = vlaneseq
  %v847 = vshrl.u32 %v846, 7
  %v848 = vsub.s32 0, %v847
  %v849 = vrot.slane %v813, %v848
  %v850 = vadd.f32 %v844, %v849
  %v851 = vadd.f32 %v845, %v849
  %v852 = vld [vmem:[%s6] sm:$0xf]
  %v853 = vld [vmem:[%s6 + $0x4] sm:$0xf]
  %v854 = vld [vmem:[%s6 + $0x8] sm:$0xf]
  %v855 = vld [vmem:[%s6 + $0xc] sm:$0xf]
  %v856 = vld [vmem:[%s9 + $0x6] sm:$0x1]
  %v857 = vpack.c.bf16 %v851, %v850
  %v858 = vlaneseq
  %v859 = vshrl.u32 %v858, 7
  %v860 = vsub.s32 0, %v859
  %v861 = vrot.slane %v856, %v860
  %v866 = vunpack.c.l.b16 %v852
  %v867 = vunpack.c.l.b16 %v853
  %v868 = vunpack.c.l.b16 %v854
  %v869 = vunpack.c.l.b16 %v855
  %v870 = vpack.c.b16 %v867, %v866
  %v871 = vpack.c.b16 %v869, %v868
  %v875 = vsel %vm133, %v857, 0
  %877 = vmatprep.subr.bf16.mxu0 0
  %878 = vmatpush1.bf16.msra.mxu0 %v870
  %879 = vmatprep.subr.bf16.mxu0 0
  %880 = vmatpush1.bf16.msra.mxu0 %v871
  %881 = vmatprep.subr.bf16.mxu0 0
  %882 = vmatpush1.bf16.msra.mxu0 0
  %883 = vmatprep.subr.bf16.mxu0 0
  %884 = vmatpush1.bf16.msra.mxu0 0
  %885 = vmatprep.subr.bf16.mxu0 0
  %886 = vmatpush1.bf16.msra.mxu0 0
  %887 = vmatprep.subr.bf16.mxu0 0
  %888 = vmatpush1.bf16.msra.mxu0 0
  %889 = vmatprep.subr.bf16.mxu0 0
  %890 = vmatpush1.bf16.msra.mxu0 0
  %891 = vmatprep.subr.bf16.mxu0 0
  %892 = vmatpush1.bf16.msra.mxu0 0
  %893 = vmatprep.subr.bf16.mxu0 0
  %894 = vmatpush1.bf16.msra.mxu0 0
  %895 = vmatprep.subr.bf16.mxu0 0
  %896 = vmatpush1.bf16.msra.mxu0 0
  %897 = vmatprep.subr.bf16.mxu0 0
  %898 = vmatpush1.bf16.msra.mxu0 0
  %899 = vmatprep.subr.bf16.mxu0 0
  %900 = vmatpush1.bf16.msra.mxu0 0
  %901 = vmatprep.subr.bf16.mxu0 0
  %902 = vmatpush1.bf16.msra.mxu0 0
  %903 = vmatprep.subr.bf16.mxu0 0
  %904 = vmatpush1.bf16.msra.mxu0 0
  %905 = vmatprep.subr.bf16.mxu0 0
  %906 = vmatpush1.bf16.msra.mxu0 0
  %907 = vmatprep.subr.bf16.mxu0 0
  %908 = vmatpush1.bf16.msra.mxu0 0
  %909 = vmatprep.mubr.bf16.mxu0 0
  %910 = vmatmul.mubr.bf16.gmra.mrb[0].mxu0 %v875
  %v911 = vpop.f32.mrb[0].mxu0
  %v912 = vadd.f32 %v861, %v911
  %v913 = vpop.f32.mrb[0].mxu0
  %v914 = vpop.f32.mrb[0].mxu0
  %v915 = vadd.f32 %v861, %v914
  %v916 = vpop.f32.mrb[0].mxu0
  %917 = vdwg.mxu0
  %v918 = vmul.f32 %v912, 0.5
  %v919 = vmul.f32 %v915, 0.5
  %v920 = vmul.f32 %v912, 0.70710677
  %v921 = vmul.f32 %v915, 0.70710677
  %v922 = verf.f32.pop %v920
  %v923 = verf.f32.pop %v921
  %v924 = vadd.f32 %v922, 1.0
  %v925 = vadd.f32 %v923, 1.0
  %v926 = vmul.f32 %v918, %v924
  %v927 = vmul.f32 %v919, %v925
  %v928 = vld [vmem:[%s7] sm:$0xf]
  %v929 = vld [vmem:[%s7 + $0x4] sm:$0xf]
  %v930 = vld [vmem:[%s7 + $0x8] sm:$0xf]
  %v931 = vld [vmem:[%s7 + $0xc] sm:$0xf]
  %v932 = vld [vmem:[%s7 + $0x10] sm:$0xf]
  %v933 = vld [vmem:[%s7 + $0x14] sm:$0xf]
  %v934 = vld [vmem:[%s7 + $0x18] sm:$0xf]
  %v935 = vld [vmem:[%s7 + $0x1c] sm:$0xf]
  %v936 = vld [vmem:[%s7 + $0x20] sm:$0xf]
  %v937 = vld [vmem:[%s7 + $0x24] sm:$0xf]
  %v938 = vld [vmem:[%s7 + $0x28] sm:$0xf]
  %v939 = vld [vmem:[%s7 + $0x2c] sm:$0xf]
  %v940 = vld [vmem:[%s7 + $0x30] sm:$0xf]
  %v941 = vld [vmem:[%s7 + $0x34] sm:$0xf]
  %v942 = vld [vmem:[%s7 + $0x38] sm:$0xf]
  %v943 = vld [vmem:[%s7 + $0x3c] sm:$0xf]
  %v944 = vld [vmem:[%s9 + $0x7] sm:$0x1]
  %v945 = vpack.c.bf16 %v927, %v926
  %v946 = vlaneseq
  %v947 = vshrl.u32 %v946, 7
  %v948 = vsub.s32 0, %v947
  %v949 = vrot.slane %v944, %v948
  %v966 = vunpack.c.l.b16 %v928
  %v967 = vunpack.c.l.b16 %v929
  %v968 = vunpack.c.l.b16 %v930
  %v969 = vunpack.c.l.b16 %v931
  %v970 = vunpack.c.l.b16 %v932
  %v971 = vunpack.c.l.b16 %v933
  %v972 = vunpack.c.l.b16 %v934
  %v973 = vunpack.c.l.b16 %v935
  %v974 = vunpack.c.l.b16 %v936
  %v975 = vunpack.c.l.b16 %v937
  %v976 = vunpack.c.l.b16 %v938
  %v977 = vunpack.c.l.b16 %v939
  %v978 = vunpack.c.l.b16 %v940
  %v979 = vunpack.c.l.b16 %v941
  %v980 = vunpack.c.l.b16 %v942
  %v981 = vunpack.c.l.b16 %v943
  %v982 = vpack.c.b16 %v967, %v966
  %v983 = vpack.c.b16 %v969, %v968
  %v984 = vpack.c.b16 %v971, %v970
  %v985 = vpack.c.b16 %v973, %v972
  %v986 = vpack.c.b16 %v975, %v974
  %v987 = vpack.c.b16 %v977, %v976
  %v988 = vpack.c.b16 %v979, %v978
  %v989 = vpack.c.b16 %v981, %v980
  %998 = vmatprep.subr.bf16.mxu0 0
  %999 = vmatpush1.bf16.msra.mxu0 %v982
  %1000 = vmatprep.subr.bf16.mxu0 0
  %1001 = vmatpush1.bf16.msra.mxu0 %v983
  %1002 = vmatprep.subr.bf16.mxu0 0
  %1003 = vmatpush1.bf16.msra.mxu0 %v984
  %1004 = vmatprep.subr.bf16.mxu0 0
  %1005 = vmatpush1.bf16.msra.mxu0 %v985
  %1006 = vmatprep.subr.bf16.mxu0 0
  %1007 = vmatpush1.bf16.msra.mxu0 %v986
  %1008 = vmatprep.subr.bf16.mxu0 0
  %1009 = vmatpush1.bf16.msra.mxu0 %v987
  %1010 = vmatprep.subr.bf16.mxu0 0
  %1011 = vmatpush1.bf16.msra.mxu0 %v988
  %1012 = vmatprep.subr.bf16.mxu0 0
  %1013 = vmatpush1.bf16.msra.mxu0 %v989
  %1014 = vmatprep.subr.bf16.mxu0 0
  %1015 = vmatpush1.bf16.msra.mxu0 0
  %1016 = vmatprep.subr.bf16.mxu0 0
  %1017 = vmatpush1.bf16.msra.mxu0 0
  %1018 = vmatprep.subr.bf16.mxu0 0
  %1019 = vmatpush1.bf16.msra.mxu0 0
  %1020 = vmatprep.subr.bf16.mxu0 0
  %1021 = vmatpush1.bf16.msra.mxu0 0
  %1022 = vmatprep.subr.bf16.mxu0 0
  %1023 = vmatpush1.bf16.msra.mxu0 0
  %1024 = vmatprep.subr.bf16.mxu0 0
  %1025 = vmatpush1.bf16.msra.mxu0 0
  %1026 = vmatprep.subr.bf16.mxu0 0
  %1027 = vmatpush1.bf16.msra.mxu0 0
  %1028 = vmatprep.subr.bf16.mxu0 0
  %1029 = vmatpush1.bf16.msra.mxu0 0
  %1030 = vmatprep.mubr.bf16.mxu0 0
  %1031 = vmatmul.mubr.bf16.gmra.mrb[0].mxu0 %v945
  %v1032 = vpop.f32.mrb[0].mxu0
  %v1033 = vadd.f32 %v949, %v1032
  %v1034 = vpop.f32.mrb[0].mxu0
  %v1035 = vpop.f32.mrb[0].mxu0
  %v1036 = vadd.f32 %v949, %v1035
  %v1037 = vpop.f32.mrb[0].mxu0
  %1038 = vdwg.mxu0
  %v1039 = vadd.f32 %v1033, %v850
  %v1040 = vadd.f32 %v1036, %v851
  %v1041 = vld [vmem:[%s9 + $0x8] sm:$0x1]
  %v1042 = vld [vmem:[%s9 + $0x9] sm:$0x1]
  %v1043 = vsel %vm133, %v1039, 0.0
  %1044 = vadd.xlane.f32.xlu0 %v1043
  %v1045 = vpop.xlane.xlu0 %1044
  %v1046 = vsel %vm133, %v1040, 0.0
  %1047 = vadd.xlane.f32.xlu0 %v1046
  %v1048 = vpop.xlane.xlu0 %1047
  %v1049 = vmul.f32 %v1045, %v140
  %v1050 = vmul.f32 %v1048, %v140
  %v1051 = vsub.f32 %v1039, %v1049
  %v1052 = vsub.f32 %v1040, %v1050
  %v1053 = vmul.f32 %v1051, %v1051
  %v1054 = vmul.f32 %v1052, %v1052
  %v1055 = vsel %vm133, %v1053, 0.0
  %1056 = vadd.xlane.f32.xlu0 %v1055
  %v1057 = vpop.xlane.xlu0 %1056
  %v1058 = vsel %vm133, %v1054, 0.0
  %1059 = vadd.xlane.f32.xlu0 %v1058
  %v1060 = vpop.xlane.xlu0 %1059
  %v1061 = vmul.f32 %v1057, %v140
  %v1062 = vmul.f32 %v1060, %v140
  %v1063 = vadd.f32 %v1061, 1e-12
  %v1064 = vadd.f32 %v1062, 1e-12
  %v1065 = vrsqrt.pop %v1063
  %v1066 = vrsqrt.pop %v1064
  %v1067 = vmul.f32 %v1051, %v1065
  %v1068 = vmul.f32 %v1052, %v1066
  %v1069 = vlaneseq
  %v1070 = vshrl.u32 %v1069, 7
  %v1071 = vsub.s32 0, %v1070
  %v1072 = vrot.slane %v1041, %v1071
  %v1073 = vmul.f32 %v1067, %v1072
  %v1074 = vmul.f32 %v1068, %v1072
  %v1075 = vlaneseq
  %v1076 = vshrl.u32 %v1075, 7
  %v1077 = vsub.s32 0, %v1076
  %v1078 = vrot.slane %v1042, %v1077
  %v1079 = vadd.f32 %v1073, %v1078
  %v1080 = vadd.f32 %v1074, %v1078
  %s1081 = scalar_lea.vmem %s4, 16
  %v1082 = vld [vmem:[%s1081] sm:$0xf]
  %v1083 = vld [vmem:[%s1081 + $0x4] sm:$0xf]
  %v1084 = vld [vmem:[%s1081 + $0x8] sm:$0xf]
  %v1085 = vld [vmem:[%s1081 + $0xc] sm:$0xf]
  %v1086 = vld [vmem:[%s9 + $0xa] sm:$0x1]
  %v1087 = vpack.c.bf16 %v1080, %v1079
  %v1088 = vlaneseq
  %v1089 = vshrl.u32 %v1088, 7
  %v1090 = vsub.s32 0, %v1089
  %v1091 = vrot.slane %v1086, %v1090
  %v1096 = vunpack.c.l.b16 %v1082
  %v1097 = vunpack.c.l.b16 %v1083
  %v1098 = vunpack.c.l.b16 %v1084
  %v1099 = vunpack.c.l.b16 %v1085
  %v1100 = vpack.c.b16 %v1097, %v1096
  %v1101 = vpack.c.b16 %v1099, %v1098
  %v1105 = vsel %vm133, %v1087, 0
  %1107 = vmatprep.subr.bf16.mxu0 0
  %1108 = vmatpush1.bf16.msra.mxu0 %v1100
  %1109 = vmatprep.subr.bf16.mxu0 0
  %1110 = vmatpush1.bf16.msra.mxu0 %v1101
  %1111 = vmatprep.subr.bf16.mxu0 0
  %1112 = vmatpush1.bf16.msra.mxu0 0
  %1113 = vmatprep.subr.bf16.mxu0 0
  %1114 = vmatpush1.bf16.msra.mxu0 0
  %1115 = vmatprep.subr.bf16.mxu0 0
  %1116 = vmatpush1.bf16.msra.mxu0 0
  %1117 = vmatprep.subr.bf16.mxu0 0
  %1118 = vmatpush1.bf16.msra.mxu0 0
  %1119 = vmatprep.subr.bf16.mxu0 0
  %1120 = vmatpush1.bf16.msra.mxu0 0
  %1121 = vmatprep.subr.bf16.mxu0 0
  %1122 = vmatpush1.bf16.msra.mxu0 0
  %1123 = vmatprep.subr.bf16.mxu0 0
  %1124 = vmatpush1.bf16.msra.mxu0 0
  %1125 = vmatprep.subr.bf16.mxu0 0
  %1126 = vmatpush1.bf16.msra.mxu0 0
  %1127 = vmatprep.subr.bf16.mxu0 0
  %1128 = vmatpush1.bf16.msra.mxu0 0
  %1129 = vmatprep.subr.bf16.mxu0 0
  %1130 = vmatpush1.bf16.msra.mxu0 0
  %1131 = vmatprep.subr.bf16.mxu0 0
  %1132 = vmatpush1.bf16.msra.mxu0 0
  %1133 = vmatprep.subr.bf16.mxu0 0
  %1134 = vmatpush1.bf16.msra.mxu0 0
  %1135 = vmatprep.subr.bf16.mxu0 0
  %1136 = vmatpush1.bf16.msra.mxu0 0
  %1137 = vmatprep.subr.bf16.mxu0 0
  %1138 = vmatpush1.bf16.msra.mxu0 0
  %1139 = vmatprep.mubr.bf16.mxu0 0
  %1140 = vmatmul.mubr.bf16.gmra.mrb[0].mxu0 %v1105
  %v1141 = vpop.f32.mrb[0].mxu0
  %v1142 = vadd.f32 %v1091, %v1141
  %v1143 = vpop.f32.mrb[0].mxu0
  %v1144 = vpop.f32.mrb[0].mxu0
  %v1145 = vadd.f32 %v1091, %v1144
  %v1146 = vpop.f32.mrb[0].mxu0
  %1147 = vdwg.mxu0
  %v1148 = vpack.c.bf16 %v1145, %v1142
  %v1149 = vmul.f32 %v1142, %v179
  %v1150 = vmul.f32 %v1145, %v179
  %v1151 = vpack.c.bf16 %v1150, %v1149
  %1153 = vrot.lane.b32.xlu0 %v1148, 96
  %v1154 = vpop.permute.xlu0 %1153
  %v1156 = vsel %vm133, %v1151, 0
  %v1159 = vsel %vm133, %v1154, 0
  %1161 = vmatprep.subr.bf16.mxu0 0
  %1162 = vmatpush1.bf16.xpose.msra.mxu0 %v1159
  %1163 = vmatprep.subr.bf16.mxu0 0
  %1164 = vmatpush1.bf16.xpose.msra.mxu0 0
  %1165 = vmatprep.subr.bf16.mxu0 0
  %1166 = vmatpush1.bf16.xpose.msra.mxu0 0
  %1167 = vmatprep.subr.bf16.mxu0 0
  %1168 = vmatpush1.bf16.xpose.msra.mxu0 0
  %1169 = vmatprep.subr.bf16.mxu0 0
  %1170 = vmatpush1.bf16.xpose.msra.mxu0 0
  %1171 = vmatprep.subr.bf16.mxu0 0
  %1172 = vmatpush1.bf16.xpose.msra.mxu0 0
  %1173 = vmatprep.subr.bf16.mxu0 0
  %1174 = vmatpush1.bf16.xpose.msra.mxu0 0
  %1175 = vmatprep.subr.bf16.mxu0 0
  %1176 = vmatpush1.bf16.xpose.msra.mxu0 0
  %1177 = vmatprep.subr.bf16.mxu0 0
  %1178 = vmatpush1.bf16.xpose.msra.mxu0 0
  %1179 = vmatprep.subr.bf16.mxu0 0
  %1180 = vmatpush1.bf16.xpose.msra.mxu0 0
  %1181 = vmatprep.subr.bf16.mxu0 0
  %1182 = vmatpush1.bf16.xpose.msra.mxu0 0
  %1183 = vmatprep.subr.bf16.mxu0 0
  %1184 = vmatpush1.bf16.xpose.msra.mxu0 0
  %1185 = vmatprep.subr.bf16.mxu0 0
  %1186 = vmatpush1.bf16.xpose.msra.mxu0 0
  %1187 = vmatprep.subr.bf16.mxu0 0
  %1188 = vmatpush1.bf16.xpose.msra.mxu0 0
  %1189 = vmatprep.subr.bf16.mxu0 0
  %1190 = vmatpush1.bf16.xpose.msra.mxu0 0
  %1191 = vmatprep.subr.bf16.mxu0 0
  %1192 = vmatpush1.bf16.xpose.msra.mxu0 0
  %1193 = vmatprep.mubr.bf16.mxu0 0
  %1194 = vmatmul.mubr.bf16.gmra.mrb[0].mxu0 %v1156
  %v1195 = vpop.f32.mrb[0].mxu0
  %v1196 = vadd.f32 %v173, %v1195
  %v1197 = vpop.f32.mrb[0].mxu0
  %v1198 = vpop.f32.mrb[0].mxu0
  %v1199 = vadd.f32 %v174, %v1198
  %v1200 = vpop.f32.mrb[0].mxu0
  %1201 = vdwg.mxu0
  %v1202 = vsel %vm315, %v1196, -inf
  %1203 = vmax.xlane.f32.xlu0 %v1202
  %v1204 = vpop.xlane.xlu0 %1203
  %v1205 = vsel %vm315, %v1199, -inf
  %1206 = vmax.xlane.f32.xlu0 %v1205
  %v1207 = vpop.xlane.xlu0 %1206
  %v1208 = vsub.f32 %v1196, %v1204
  %v1209 = vsub.f32 %v1199, %v1207
  %v1210 = vmul.f32 %v1208, 1.442695
  %v1211 = vpow.pop %v1210
  %v1212 = vmul.f32 %v1209, 1.442695
  %v1213 = vpow.pop %v1212
  %v1214 = vsel %vm315, %v1211, 0.0
  %1215 = vadd.xlane.f32.xlu0 %v1214
  %v1216 = vpop.xlane.xlu0 %1215
  %v1217 = vsel %vm315, %v1213, 0.0
  %1218 = vadd.xlane.f32.xlu0 %v1217
  %v1219 = vpop.xlane.xlu0 %1218
  %v1220 = vrcp.pop %v1216
  %v1221 = vrcp.pop %v1219
  %v1222 = vmul.f32 %v1211, %v1220
  %v1223 = vmul.f32 %v1213, %v1221
  %v1224 = vpack.c.bf16 %v1223, %v1222
  %1225 = vrot.lane.b32.xlu0 %v1148, 64
  %v1226 = vpop.permute.xlu0 %1225
  %v1229 = vsel %vm315, %v1224, 0
  %1231 = vmatprep.subr.bf16.mxu0 0
  %1232 = vmatpush1.bf16.msra.mxu0 %v1226
  %1233 = vmatprep.subr.bf16.mxu0 0
  %1234 = vmatpush1.bf16.msra.mxu0 0
  %1235 = vmatprep.subr.bf16.mxu0 0
  %1236 = vmatpush1.bf16.msra.mxu0 0
  %1237 = vmatprep.subr.bf16.mxu0 0
  %1238 = vmatpush1.bf16.msra.mxu0 0
  %1239 = vmatprep.subr.bf16.mxu0 0
  %1240 = vmatpush1.bf16.msra.mxu0 0
  %1241 = vmatprep.subr.bf16.mxu0 0
  %1242 = vmatpush1.bf16.msra.mxu0 0
  %1243 = vmatprep.subr.bf16.mxu0 0
  %1244 = vmatpush1.bf16.msra.mxu0 0
  %1245 = vmatprep.subr.bf16.mxu0 0
  %1246 = vmatpush1.bf16.msra.mxu0 0
  %1247 = vmatprep.subr.bf16.mxu0 0
  %1248 = vmatpush1.bf16.msra.mxu0 0
  %1249 = vmatprep.subr.bf16.mxu0 0
  %1250 = vmatpush1.bf16.msra.mxu0 0
  %1251 = vmatprep.subr.bf16.mxu0 0
  %1252 = vmatpush1.bf16.msra.mxu0 0
  %1253 = vmatprep.subr.bf16.mxu0 0
  %1254 = vmatpush1.bf16.msra.mxu0 0
  %1255 = vmatprep.subr.bf16.mxu0 0
  %1256 = vmatpush1.bf16.msra.mxu0 0
  %1257 = vmatprep.subr.bf16.mxu0 0
  %1258 = vmatpush1.bf16.msra.mxu0 0
  %1259 = vmatprep.subr.bf16.mxu0 0
  %1260 = vmatpush1.bf16.msra.mxu0 0
  %1261 = vmatprep.subr.bf16.mxu0 0
  %1262 = vmatpush1.bf16.msra.mxu0 0
  %1263 = vmatprep.mubr.bf16.mxu0 0
  %1264 = vmatmul.mubr.bf16.gmra.mrb[0].mxu0 %v1229
  %v1265 = vpop.f32.mrb[0].mxu0
  %v1266 = vadd.f32 0.0, %v1265
  %v1267 = vpop.f32.mrb[0].mxu0
  %v1268 = vpop.f32.mrb[0].mxu0
  %v1269 = vadd.f32 0.0, %v1268
  %v1270 = vpop.f32.mrb[0].mxu0
  %1271 = vdwg.mxu0
  %v1272 = vmul.f32 %v179, %v1266
  %v1273 = vmul.f32 %v179, %v1269
  %v1274 = vadd.f32 %v1272, 0.0
  %v1275 = vadd.f32 %v1273, 0.0
  %v1276 = vmul.f32 %v1142, %v184
  %v1277 = vmul.f32 %v1145, %v184
  %v1278 = vpack.c.bf16 %v1277, %v1276
  %v1280 = vsel %vm133, %v1278, 0
  %1282 = vmatprep.subr.bf16.mxu0 0
  %1283 = vmatpush1.bf16.xpose.msra.mxu0 %v1159
  %1284 = vmatprep.subr.bf16.mxu0 0
  %1285 = vmatpush1.bf16.xpose.msra.mxu0 0
  %1286 = vmatprep.subr.bf16.mxu0 0
  %1287 = vmatpush1.bf16.xpose.msra.mxu0 0
  %1288 = vmatprep.subr.bf16.mxu0 0
  %1289 = vmatpush1.bf16.xpose.msra.mxu0 0
  %1290 = vmatprep.subr.bf16.mxu0 0
  %1291 = vmatpush1.bf16.xpose.msra.mxu0 0
  %1292 = vmatprep.subr.bf16.mxu0 0
  %1293 = vmatpush1.bf16.xpose.msra.mxu0 0
  %1294 = vmatprep.subr.bf16.mxu0 0
  %1295 = vmatpush1.bf16.xpose.msra.mxu0 0
  %1296 = vmatprep.subr.bf16.mxu0 0
  %1297 = vmatpush1.bf16.xpose.msra.mxu0 0
  %1298 = vmatprep.subr.bf16.mxu0 0
  %1299 = vmatpush1.bf16.xpose.msra.mxu0 0
  %1300 = vmatprep.subr.bf16.mxu0 0
  %1301 = vmatpush1.bf16.xpose.msra.mxu0 0
  %1302 = vmatprep.subr.bf16.mxu0 0
  %1303 = vmatpush1.bf16.xpose.msra.mxu0 0
  %1304 = vmatprep.subr.bf16.mxu0 0
  %1305 = vmatpush1.bf16.xpose.msra.mxu0 0
  %1306 = vmatprep.subr.bf16.mxu0 0
  %1307 = vmatpush1.bf16.xpose.msra.mxu0 0
  %1308 = vmatprep.subr.bf16.mxu0 0
  %1309 = vmatpush1.bf16.xpose.msra.mxu0 0
  %1310 = vmatprep.subr.bf16.mxu0 0
  %1311 = vmatpush1.bf16.xpose.msra.mxu0 0
  %1312 = vmatprep.subr.bf16.mxu0 0
  %1313 = vmatpush1.bf16.xpose.msra.mxu0 0
  %1314 = vmatprep.mubr.bf16.mxu0 0
  %1315 = vmatmul.mubr.bf16.gmra.mrb[0].mxu0 %v1280
  %v1316 = vpop.f32.mrb[0].mxu0
  %v1317 = vadd.f32 %v173, %v1316
  %v1318 = vpop.f32.mrb[0].mxu0
  %v1319 = vpop.f32.mrb[0].mxu0
  %v1320 = vadd.f32 %v174, %v1319
  %v1321 = vpop.f32.mrb[0].mxu0
  %1322 = vdwg.mxu0
  %v1323 = vsel %vm315, %v1317, -inf
  %1324 = vmax.xlane.f32.xlu0 %v1323
  %v1325 = vpop.xlane.xlu0 %1324
  %v1326 = vsel %vm315, %v1320, -inf
  %1327 = vmax.xlane.f32.xlu0 %v1326
  %v1328 = vpop.xlane.xlu0 %1327
  %v1329 = vsub.f32 %v1317, %v1325
  %v1330 = vsub.f32 %v1320, %v1328
  %v1331 = vmul.f32 %v1329, 1.442695
  %v1332 = vpow.pop %v1331
  %v1333 = vmul.f32 %v1330, 1.442695
  %v1334 = vpow.pop %v1333
  %v1335 = vsel %vm315, %v1332, 0.0
  %1336 = vadd.xlane.f32.xlu0 %v1335
  %v1337 = vpop.xlane.xlu0 %1336
  %v1338 = vsel %vm315, %v1334, 0.0
  %1339 = vadd.xlane.f32.xlu0 %v1338
  %v1340 = vpop.xlane.xlu0 %1339
  %v1341 = vrcp.pop %v1337
  %v1342 = vrcp.pop %v1340
  %v1343 = vmul.f32 %v1332, %v1341
  %v1344 = vmul.f32 %v1334, %v1342
  %v1345 = vpack.c.bf16 %v1344, %v1343
  %v1347 = vsel %vm315, %v1345, 0
  %1349 = vmatprep.subr.bf16.mxu0 0
  %1350 = vmatpush1.bf16.msra.mxu0 %v1226
  %1351 = vmatprep.subr.bf16.mxu0 0
  %1352 = vmatpush1.bf16.msra.mxu0 0
  %1353 = vmatprep.subr.bf16.mxu0 0
  %1354 = vmatpush1.bf16.msra.mxu0 0
  %1355 = vmatprep.subr.bf16.mxu0 0
  %1356 = vmatpush1.bf16.msra.mxu0 0
  %1357 = vmatprep.subr.bf16.mxu0 0
  %1358 = vmatpush1.bf16.msra.mxu0 0
  %1359 = vmatprep.subr.bf16.mxu0 0
  %1360 = vmatpush1.bf16.msra.mxu0 0
  %1361 = vmatprep.subr.bf16.mxu0 0
  %1362 = vmatpush1.bf16.msra.mxu0 0
  %1363 = vmatprep.subr.bf16.mxu0 0
  %1364 = vmatpush1.bf16.msra.mxu0 0
  %1365 = vmatprep.subr.bf16.mxu0 0
  %1366 = vmatpush1.bf16.msra.mxu0 0
  %1367 = vmatprep.subr.bf16.mxu0 0
  %1368 = vmatpush1.bf16.msra.mxu0 0
  %1369 = vmatprep.subr.bf16.mxu0 0
  %1370 = vmatpush1.bf16.msra.mxu0 0
  %1371 = vmatprep.subr.bf16.mxu0 0
  %1372 = vmatpush1.bf16.msra.mxu0 0
  %1373 = vmatprep.subr.bf16.mxu0 0
  %1374 = vmatpush1.bf16.msra.mxu0 0
  %1375 = vmatprep.subr.bf16.mxu0 0
  %1376 = vmatpush1.bf16.msra.mxu0 0
  %1377 = vmatprep.subr.bf16.mxu0 0
  %1378 = vmatpush1.bf16.msra.mxu0 0
  %1379 = vmatprep.subr.bf16.mxu0 0
  %1380 = vmatpush1.bf16.msra.mxu0 0
  %1381 = vmatprep.mubr.bf16.mxu0 0
  %1382 = vmatmul.mubr.bf16.gmra.mrb[0].mxu0 %v1347
  %v1383 = vpop.f32.mrb[0].mxu0
  %v1384 = vadd.f32 0.0, %v1383
  %v1385 = vpop.f32.mrb[0].mxu0
  %v1386 = vpop.f32.mrb[0].mxu0
  %v1387 = vadd.f32 0.0, %v1386
  %v1388 = vpop.f32.mrb[0].mxu0
  %1389 = vdwg.mxu0
  %v1390 = vmul.f32 %v184, %v1384
  %v1391 = vmul.f32 %v184, %v1387
  %v1392 = vadd.f32 %v1274, %v1390
  %v1393 = vadd.f32 %v1275, %v1391
  %v1394 = vmul.f32 %v1142, %v189
  %v1395 = vmul.f32 %v1145, %v189
  %v1396 = vpack.c.bf16 %v1395, %v1394
  %v1398 = vsel %vm133, %v1396, 0
  %1400 = vmatprep.subr.bf16.mxu0 0
  %1401 = vmatpush1.bf16.xpose.msra.mxu0 %v1159
  %1402 = vmatprep.subr.bf16.mxu0 0
  %1403 = vmatpush1.bf16.xpose.msra.mxu0 0
  %1404 = vmatprep.subr.bf16.mxu0 0
  %1405 = vmatpush1.bf16.xpose.msra.mxu0 0
  %1406 = vmatprep.subr.bf16.mxu0 0
  %1407 = vmatpush1.bf16.xpose.msra.mxu0 0
  %1408 = vmatprep.subr.bf16.mxu0 0
  %1409 = vmatpush1.bf16.xpose.msra.mxu0 0
  %1410 = vmatprep.subr.bf16.mxu0 0
  %1411 = vmatpush1.bf16.xpose.msra.mxu0 0
  %1412 = vmatprep.subr.bf16.mxu0 0
  %1413 = vmatpush1.bf16.xpose.msra.mxu0 0
  %1414 = vmatprep.subr.bf16.mxu0 0
  %1415 = vmatpush1.bf16.xpose.msra.mxu0 0
  %1416 = vmatprep.subr.bf16.mxu0 0
  %1417 = vmatpush1.bf16.xpose.msra.mxu0 0
  %1418 = vmatprep.subr.bf16.mxu0 0
  %1419 = vmatpush1.bf16.xpose.msra.mxu0 0
  %1420 = vmatprep.subr.bf16.mxu0 0
  %1421 = vmatpush1.bf16.xpose.msra.mxu0 0
  %1422 = vmatprep.subr.bf16.mxu0 0
  %1423 = vmatpush1.bf16.xpose.msra.mxu0 0
  %1424 = vmatprep.subr.bf16.mxu0 0
  %1425 = vmatpush1.bf16.xpose.msra.mxu0 0
  %1426 = vmatprep.subr.bf16.mxu0 0
  %1427 = vmatpush1.bf16.xpose.msra.mxu0 0
  %1428 = vmatprep.subr.bf16.mxu0 0
  %1429 = vmatpush1.bf16.xpose.msra.mxu0 0
  %1430 = vmatprep.subr.bf16.mxu0 0
  %1431 = vmatpush1.bf16.xpose.msra.mxu0 0
  %1432 = vmatprep.mubr.bf16.mxu0 0
  %1433 = vmatmul.mubr.bf16.gmra.mrb[0].mxu0 %v1398
  %v1434 = vpop.f32.mrb[0].mxu0
  %v1435 = vadd.f32 %v173, %v1434
  %v1436 = vpop.f32.mrb[0].mxu0
  %v1437 = vpop.f32.mrb[0].mxu0
  %v1438 = vadd.f32 %v174, %v1437
  %v1439 = vpop.f32.mrb[0].mxu0
  %1440 = vdwg.mxu0
  %v1441 = vsel %vm315, %v1435, -inf
  %1442 = vmax.xlane.f32.xlu0 %v1441
  %v1443 = vpop.xlane.xlu0 %1442
  %v1444 = vsel %vm315, %v1438, -inf
  %1445 = vmax.xlane.f32.xlu0 %v1444
  %v1446 = vpop.xlane.xlu0 %1445
  %v1447 = vsub.f32 %v1435, %v1443
  %v1448 = vsub.f32 %v1438, %v1446
  %v1449 = vmul.f32 %v1447, 1.442695
  %v1450 = vpow.pop %v1449
  %v1451 = vmul.f32 %v1448, 1.442695
  %v1452 = vpow.pop %v1451
  %v1453 = vsel %vm315, %v1450, 0.0
  %1454 = vadd.xlane.f32.xlu0 %v1453
  %v1455 = vpop.xlane.xlu0 %1454
  %v1456 = vsel %vm315, %v1452, 0.0
  %1457 = vadd.xlane.f32.xlu0 %v1456
  %v1458 = vpop.xlane.xlu0 %1457
  %v1459 = vrcp.pop %v1455
  %v1460 = vrcp.pop %v1458
  %v1461 = vmul.f32 %v1450, %v1459
  %v1462 = vmul.f32 %v1452, %v1460
  %v1463 = vpack.c.bf16 %v1462, %v1461
  %v1465 = vsel %vm315, %v1463, 0
  %1467 = vmatprep.subr.bf16.mxu0 0
  %1468 = vmatpush1.bf16.msra.mxu0 %v1226
  %1469 = vmatprep.subr.bf16.mxu0 0
  %1470 = vmatpush1.bf16.msra.mxu0 0
  %1471 = vmatprep.subr.bf16.mxu0 0
  %1472 = vmatpush1.bf16.msra.mxu0 0
  %1473 = vmatprep.subr.bf16.mxu0 0
  %1474 = vmatpush1.bf16.msra.mxu0 0
  %1475 = vmatprep.subr.bf16.mxu0 0
  %1476 = vmatpush1.bf16.msra.mxu0 0
  %1477 = vmatprep.subr.bf16.mxu0 0
  %1478 = vmatpush1.bf16.msra.mxu0 0
  %1479 = vmatprep.subr.bf16.mxu0 0
  %1480 = vmatpush1.bf16.msra.mxu0 0
  %1481 = vmatprep.subr.bf16.mxu0 0
  %1482 = vmatpush1.bf16.msra.mxu0 0
  %1483 = vmatprep.subr.bf16.mxu0 0
  %1484 = vmatpush1.bf16.msra.mxu0 0
  %1485 = vmatprep.subr.bf16.mxu0 0
  %1486 = vmatpush1.bf16.msra.mxu0 0
  %1487 = vmatprep.subr.bf16.mxu0 0
  %1488 = vmatpush1.bf16.msra.mxu0 0
  %1489 = vmatprep.subr.bf16.mxu0 0
  %1490 = vmatpush1.bf16.msra.mxu0 0
  %1491 = vmatprep.subr.bf16.mxu0 0
  %1492 = vmatpush1.bf16.msra.mxu0 0
  %1493 = vmatprep.subr.bf16.mxu0 0
  %1494 = vmatpush1.bf16.msra.mxu0 0
  %1495 = vmatprep.subr.bf16.mxu0 0
  %1496 = vmatpush1.bf16.msra.mxu0 0
  %1497 = vmatprep.subr.bf16.mxu0 0
  %1498 = vmatpush1.bf16.msra.mxu0 0
  %1499 = vmatprep.mubr.bf16.mxu0 0
  %1500 = vmatmul.mubr.bf16.gmra.mrb[0].mxu0 %v1465
  %v1501 = vpop.f32.mrb[0].mxu0
  %v1502 = vadd.f32 0.0, %v1501
  %v1503 = vpop.f32.mrb[0].mxu0
  %v1504 = vpop.f32.mrb[0].mxu0
  %v1505 = vadd.f32 0.0, %v1504
  %v1506 = vpop.f32.mrb[0].mxu0
  %1507 = vdwg.mxu0
  %v1508 = vmul.f32 %v189, %v1502
  %v1509 = vmul.f32 %v189, %v1505
  %v1510 = vadd.f32 %v1392, %v1508
  %v1511 = vadd.f32 %v1393, %v1509
  %v1512 = vmul.f32 %v1142, %v194
  %v1513 = vmul.f32 %v1145, %v194
  %v1514 = vpack.c.bf16 %v1513, %v1512
  %v1516 = vsel %vm133, %v1514, 0
  %1518 = vmatprep.subr.bf16.mxu0 0
  %1519 = vmatpush1.bf16.xpose.msra.mxu0 %v1159
  %1520 = vmatprep.subr.bf16.mxu0 0
  %1521 = vmatpush1.bf16.xpose.msra.mxu0 0
  %1522 = vmatprep.subr.bf16.mxu0 0
  %1523 = vmatpush1.bf16.xpose.msra.mxu0 0
  %1524 = vmatprep.subr.bf16.mxu0 0
  %1525 = vmatpush1.bf16.xpose.msra.mxu0 0
  %1526 = vmatprep.subr.bf16.mxu0 0
  %1527 = vmatpush1.bf16.xpose.msra.mxu0 0
  %1528 = vmatprep.subr.bf16.mxu0 0
  %1529 = vmatpush1.bf16.xpose.msra.mxu0 0
  %1530 = vmatprep.subr.bf16.mxu0 0
  %1531 = vmatpush1.bf16.xpose.msra.mxu0 0
  %1532 = vmatprep.subr.bf16.mxu0 0
  %1533 = vmatpush1.bf16.xpose.msra.mxu0 0
  %1534 = vmatprep.subr.bf16.mxu0 0
  %1535 = vmatpush1.bf16.xpose.msra.mxu0 0
  %1536 = vmatprep.subr.bf16.mxu0 0
  %1537 = vmatpush1.bf16.xpose.msra.mxu0 0
  %1538 = vmatprep.subr.bf16.mxu0 0
  %1539 = vmatpush1.bf16.xpose.msra.mxu0 0
  %1540 = vmatprep.subr.bf16.mxu0 0
  %1541 = vmatpush1.bf16.xpose.msra.mxu0 0
  %1542 = vmatprep.subr.bf16.mxu0 0
  %1543 = vmatpush1.bf16.xpose.msra.mxu0 0
  %1544 = vmatprep.subr.bf16.mxu0 0
  %1545 = vmatpush1.bf16.xpose.msra.mxu0 0
  %1546 = vmatprep.subr.bf16.mxu0 0
  %1547 = vmatpush1.bf16.xpose.msra.mxu0 0
  %1548 = vmatprep.subr.bf16.mxu0 0
  %1549 = vmatpush1.bf16.xpose.msra.mxu0 0
  %1550 = vmatprep.mubr.bf16.mxu0 0
  %1551 = vmatmul.mubr.bf16.gmra.mrb[0].mxu0 %v1516
  %v1552 = vpop.f32.mrb[0].mxu0
  %v1553 = vadd.f32 %v173, %v1552
  %v1554 = vpop.f32.mrb[0].mxu0
  %v1555 = vpop.f32.mrb[0].mxu0
  %v1556 = vadd.f32 %v174, %v1555
  %v1557 = vpop.f32.mrb[0].mxu0
  %1558 = vdwg.mxu0
  %v1559 = vsel %vm315, %v1553, -inf
  %1560 = vmax.xlane.f32.xlu0 %v1559
  %v1561 = vpop.xlane.xlu0 %1560
  %v1562 = vsel %vm315, %v1556, -inf
  %1563 = vmax.xlane.f32.xlu0 %v1562
  %v1564 = vpop.xlane.xlu0 %1563
  %v1565 = vsub.f32 %v1553, %v1561
  %v1566 = vsub.f32 %v1556, %v1564
  %v1567 = vmul.f32 %v1565, 1.442695
  %v1568 = vpow.pop %v1567
  %v1569 = vmul.f32 %v1566, 1.442695
  %v1570 = vpow.pop %v1569
  %v1571 = vsel %vm315, %v1568, 0.0
  %1572 = vadd.xlane.f32.xlu0 %v1571
  %v1573 = vpop.xlane.xlu0 %1572
  %v1574 = vsel %vm315, %v1570, 0.0
  %1575 = vadd.xlane.f32.xlu0 %v1574
  %v1576 = vpop.xlane.xlu0 %1575
  %v1577 = vrcp.pop %v1573
  %v1578 = vrcp.pop %v1576
  %v1579 = vmul.f32 %v1568, %v1577
  %v1580 = vmul.f32 %v1570, %v1578
  %v1581 = vpack.c.bf16 %v1580, %v1579
  %v1583 = vsel %vm315, %v1581, 0
  %1585 = vmatprep.subr.bf16.mxu0 0
  %1586 = vmatpush1.bf16.msra.mxu0 %v1226
  %1587 = vmatprep.subr.bf16.mxu0 0
  %1588 = vmatpush1.bf16.msra.mxu0 0
  %1589 = vmatprep.subr.bf16.mxu0 0
  %1590 = vmatpush1.bf16.msra.mxu0 0
  %1591 = vmatprep.subr.bf16.mxu0 0
  %1592 = vmatpush1.bf16.msra.mxu0 0
  %1593 = vmatprep.subr.bf16.mxu0 0
  %1594 = vmatpush1.bf16.msra.mxu0 0
  %1595 = vmatprep.subr.bf16.mxu0 0
  %1596 = vmatpush1.bf16.msra.mxu0 0
  %1597 = vmatprep.subr.bf16.mxu0 0
  %1598 = vmatpush1.bf16.msra.mxu0 0
  %1599 = vmatprep.subr.bf16.mxu0 0
  %1600 = vmatpush1.bf16.msra.mxu0 0
  %1601 = vmatprep.subr.bf16.mxu0 0
  %1602 = vmatpush1.bf16.msra.mxu0 0
  %1603 = vmatprep.subr.bf16.mxu0 0
  %1604 = vmatpush1.bf16.msra.mxu0 0
  %1605 = vmatprep.subr.bf16.mxu0 0
  %1606 = vmatpush1.bf16.msra.mxu0 0
  %1607 = vmatprep.subr.bf16.mxu0 0
  %1608 = vmatpush1.bf16.msra.mxu0 0
  %1609 = vmatprep.subr.bf16.mxu0 0
  %1610 = vmatpush1.bf16.msra.mxu0 0
  %1611 = vmatprep.subr.bf16.mxu0 0
  %1612 = vmatpush1.bf16.msra.mxu0 0
  %1613 = vmatprep.subr.bf16.mxu0 0
  %1614 = vmatpush1.bf16.msra.mxu0 0
  %1615 = vmatprep.subr.bf16.mxu0 0
  %1616 = vmatpush1.bf16.msra.mxu0 0
  %1617 = vmatprep.mubr.bf16.mxu0 0
  %1618 = vmatmul.mubr.bf16.gmra.mrb[0].mxu0 %v1583
  %v1619 = vpop.f32.mrb[0].mxu0
  %v1620 = vadd.f32 0.0, %v1619
  %v1621 = vpop.f32.mrb[0].mxu0
  %v1622 = vpop.f32.mrb[0].mxu0
  %v1623 = vadd.f32 0.0, %v1622
  %v1624 = vpop.f32.mrb[0].mxu0
  %1625 = vdwg.mxu0
  %v1626 = vmul.f32 %v194, %v1620
  %v1627 = vmul.f32 %v194, %v1623
  %v1628 = vadd.f32 %v1510, %v1626
  %v1629 = vadd.f32 %v1511, %v1627
  %s1630 = scalar_lea.vmem %s5, 16
  %v1631 = vld [vmem:[%s1630] sm:$0xf]
  %v1632 = vld [vmem:[%s1630 + $0x4] sm:$0xf]
  %v1633 = vld [vmem:[%s1630 + $0x8] sm:$0xf]
  %v1634 = vld [vmem:[%s1630 + $0xc] sm:$0xf]
  %v1635 = vld [vmem:[%s9 + $0xb] sm:$0x1]
  %v1636 = vpack.c.bf16 %v1629, %v1628
  %v1637 = vlaneseq
  %v1638 = vshrl.u32 %v1637, 7
  %v1639 = vsub.s32 0, %v1638
  %v1640 = vrot.slane %v1635, %v1639
  %v1645 = vunpack.c.l.b16 %v1631
  %v1646 = vunpack.c.l.b16 %v1632
  %v1647 = vunpack.c.l.b16 %v1633
  %v1648 = vunpack.c.l.b16 %v1634
  %v1649 = vpack.c.b16 %v1646, %v1645
  %v1650 = vpack.c.b16 %v1648, %v1647
  %v1654 = vsel %vm133, %v1636, 0
  %1656 = vmatprep.subr.bf16.mxu0 0
  %1657 = vmatpush1.bf16.msra.mxu0 %v1649
  %1658 = vmatprep.subr.bf16.mxu0 0
  %1659 = vmatpush1.bf16.msra.mxu0 %v1650
  %1660 = vmatprep.subr.bf16.mxu0 0
  %1661 = vmatpush1.bf16.msra.mxu0 0
  %1662 = vmatprep.subr.bf16.mxu0 0
  %1663 = vmatpush1.bf16.msra.mxu0 0
  %1664 = vmatprep.subr.bf16.mxu0 0
  %1665 = vmatpush1.bf16.msra.mxu0 0
  %1666 = vmatprep.subr.bf16.mxu0 0
  %1667 = vmatpush1.bf16.msra.mxu0 0
  %1668 = vmatprep.subr.bf16.mxu0 0
  %1669 = vmatpush1.bf16.msra.mxu0 0
  %1670 = vmatprep.subr.bf16.mxu0 0
  %1671 = vmatpush1.bf16.msra.mxu0 0
  %1672 = vmatprep.subr.bf16.mxu0 0
  %1673 = vmatpush1.bf16.msra.mxu0 0
  %1674 = vmatprep.subr.bf16.mxu0 0
  %1675 = vmatpush1.bf16.msra.mxu0 0
  %1676 = vmatprep.subr.bf16.mxu0 0
  %1677 = vmatpush1.bf16.msra.mxu0 0
  %1678 = vmatprep.subr.bf16.mxu0 0
  %1679 = vmatpush1.bf16.msra.mxu0 0
  %1680 = vmatprep.subr.bf16.mxu0 0
  %1681 = vmatpush1.bf16.msra.mxu0 0
  %1682 = vmatprep.subr.bf16.mxu0 0
  %1683 = vmatpush1.bf16.msra.mxu0 0
  %1684 = vmatprep.subr.bf16.mxu0 0
  %1685 = vmatpush1.bf16.msra.mxu0 0
  %1686 = vmatprep.subr.bf16.mxu0 0
  %1687 = vmatpush1.bf16.msra.mxu0 0
  %1688 = vmatprep.mubr.bf16.mxu0 0
  %1689 = vmatmul.mubr.bf16.gmra.mrb[0].mxu0 %v1654
  %v1690 = vpop.f32.mrb[0].mxu0
  %v1691 = vadd.f32 %v1640, %v1690
  %v1692 = vpop.f32.mrb[0].mxu0
  %v1693 = vpop.f32.mrb[0].mxu0
  %v1694 = vadd.f32 %v1640, %v1693
  %v1695 = vpop.f32.mrb[0].mxu0
  %1696 = vdwg.mxu0
  %v1697 = vadd.f32 %v1691, %v1079
  %v1698 = vadd.f32 %v1694, %v1080
  %v1699 = vld [vmem:[%s9 + $0xc] sm:$0x1]
  %v1700 = vld [vmem:[%s9 + $0xd] sm:$0x1]
  %v1701 = vsel %vm133, %v1697, 0.0
  %1702 = vadd.xlane.f32.xlu0 %v1701
  %v1703 = vpop.xlane.xlu0 %1702
  %v1704 = vsel %vm133, %v1698, 0.0
  %1705 = vadd.xlane.f32.xlu0 %v1704
  %v1706 = vpop.xlane.xlu0 %1705
  %v1707 = vmul.f32 %v1703, %v140
  %v1708 = vmul.f32 %v1706, %v140
  %v1709 = vsub.f32 %v1697, %v1707
  %v1710 = vsub.f32 %v1698, %v1708
  %v1711 = vmul.f32 %v1709, %v1709
  %v1712 = vmul.f32 %v1710, %v1710
  %v1713 = vsel %vm133, %v1711, 0.0
  %1714 = vadd.xlane.f32.xlu0 %v1713
  %v1715 = vpop.xlane.xlu0 %1714
  %v1716 = vsel %vm133, %v1712, 0.0
  %1717 = vadd.xlane.f32.xlu0 %v1716
  %v1718 = vpop.xlane.xlu0 %1717
  %v1719 = vmul.f32 %v1715, %v140
  %v1720 = vmul.f32 %v1718, %v140
  %v1721 = vadd.f32 %v1719, 1e-12
  %v1722 = vadd.f32 %v1720, 1e-12
  %v1723 = vrsqrt.pop %v1721
  %v1724 = vrsqrt.pop %v1722
  %v1725 = vmul.f32 %v1709, %v1723
  %v1726 = vmul.f32 %v1710, %v1724
  %v1727 = vlaneseq
  %v1728 = vshrl.u32 %v1727, 7
  %v1729 = vsub.s32 0, %v1728
  %v1730 = vrot.slane %v1699, %v1729
  %v1731 = vmul.f32 %v1725, %v1730
  %v1732 = vmul.f32 %v1726, %v1730
  %v1733 = vlaneseq
  %v1734 = vshrl.u32 %v1733, 7
  %v1735 = vsub.s32 0, %v1734
  %v1736 = vrot.slane %v1700, %v1735
  %v1737 = vadd.f32 %v1731, %v1736
  %v1738 = vadd.f32 %v1732, %v1736
  %s1739 = scalar_lea.vmem %s6, 16
  %v1740 = vld [vmem:[%s1739] sm:$0xf]
  %v1741 = vld [vmem:[%s1739 + $0x4] sm:$0xf]
  %v1742 = vld [vmem:[%s1739 + $0x8] sm:$0xf]
  %v1743 = vld [vmem:[%s1739 + $0xc] sm:$0xf]
  %v1744 = vld [vmem:[%s9 + $0xe] sm:$0x1]
  %v1745 = vpack.c.bf16 %v1738, %v1737
  %v1746 = vlaneseq
  %v1747 = vshrl.u32 %v1746, 7
  %v1748 = vsub.s32 0, %v1747
  %v1749 = vrot.slane %v1744, %v1748
  %v1754 = vunpack.c.l.b16 %v1740
  %v1755 = vunpack.c.l.b16 %v1741
  %v1756 = vunpack.c.l.b16 %v1742
  %v1757 = vunpack.c.l.b16 %v1743
  %v1758 = vpack.c.b16 %v1755, %v1754
  %v1759 = vpack.c.b16 %v1757, %v1756
  %v1763 = vsel %vm133, %v1745, 0
  %1765 = vmatprep.subr.bf16.mxu0 0
  %1766 = vmatpush1.bf16.msra.mxu0 %v1758
  %1767 = vmatprep.subr.bf16.mxu0 0
  %1768 = vmatpush1.bf16.msra.mxu0 %v1759
  %1769 = vmatprep.subr.bf16.mxu0 0
  %1770 = vmatpush1.bf16.msra.mxu0 0
  %1771 = vmatprep.subr.bf16.mxu0 0
  %1772 = vmatpush1.bf16.msra.mxu0 0
  %1773 = vmatprep.subr.bf16.mxu0 0
  %1774 = vmatpush1.bf16.msra.mxu0 0
  %1775 = vmatprep.subr.bf16.mxu0 0
  %1776 = vmatpush1.bf16.msra.mxu0 0
  %1777 = vmatprep.subr.bf16.mxu0 0
  %1778 = vmatpush1.bf16.msra.mxu0 0
  %1779 = vmatprep.subr.bf16.mxu0 0
  %1780 = vmatpush1.bf16.msra.mxu0 0
  %1781 = vmatprep.subr.bf16.mxu0 0
  %1782 = vmatpush1.bf16.msra.mxu0 0
  %1783 = vmatprep.subr.bf16.mxu0 0
  %1784 = vmatpush1.bf16.msra.mxu0 0
  %1785 = vmatprep.subr.bf16.mxu0 0
  %1786 = vmatpush1.bf16.msra.mxu0 0
  %1787 = vmatprep.subr.bf16.mxu0 0
  %1788 = vmatpush1.bf16.msra.mxu0 0
  %1789 = vmatprep.subr.bf16.mxu0 0
  %1790 = vmatpush1.bf16.msra.mxu0 0
  %1791 = vmatprep.subr.bf16.mxu0 0
  %1792 = vmatpush1.bf16.msra.mxu0 0
  %1793 = vmatprep.subr.bf16.mxu0 0
  %1794 = vmatpush1.bf16.msra.mxu0 0
  %1795 = vmatprep.subr.bf16.mxu0 0
  %1796 = vmatpush1.bf16.msra.mxu0 0
  %1797 = vmatprep.mubr.bf16.mxu0 0
  %1798 = vmatmul.mubr.bf16.gmra.mrb[0].mxu0 %v1763
  %v1799 = vpop.f32.mrb[0].mxu0
  %v1800 = vadd.f32 %v1749, %v1799
  %v1801 = vpop.f32.mrb[0].mxu0
  %v1802 = vpop.f32.mrb[0].mxu0
  %v1803 = vadd.f32 %v1749, %v1802
  %v1804 = vpop.f32.mrb[0].mxu0
  %1805 = vdwg.mxu0
  %v1806 = vmul.f32 %v1800, 0.5
  %v1807 = vmul.f32 %v1803, 0.5
  %v1808 = vmul.f32 %v1800, 0.70710677
  %v1809 = vmul.f32 %v1803, 0.70710677
  %v1810 = verf.f32.pop %v1808
  %v1811 = verf.f32.pop %v1809
  %v1812 = vadd.f32 %v1810, 1.0
  %v1813 = vadd.f32 %v1811, 1.0
  %v1814 = vmul.f32 %v1806, %v1812
  %v1815 = vmul.f32 %v1807, %v1813
  %s1816 = scalar_lea.vmem %s7, 64
  %v1817 = vld [vmem:[%s1816] sm:$0xf]
  %v1818 = vld [vmem:[%s1816 + $0x4] sm:$0xf]
  %v1819 = vld [vmem:[%s1816 + $0x8] sm:$0xf]
  %v1820 = vld [vmem:[%s1816 + $0xc] sm:$0xf]
  %v1821 = vld [vmem:[%s1816 + $0x10] sm:$0xf]
  %v1822 = vld [vmem:[%s1816 + $0x14] sm:$0xf]
  %v1823 = vld [vmem:[%s1816 + $0x18] sm:$0xf]
  %v1824 = vld [vmem:[%s1816 + $0x1c] sm:$0xf]
  %v1825 = vld [vmem:[%s1816 + $0x20] sm:$0xf]
  %v1826 = vld [vmem:[%s1816 + $0x24] sm:$0xf]
  %v1827 = vld [vmem:[%s1816 + $0x28] sm:$0xf]
  %v1828 = vld [vmem:[%s1816 + $0x2c] sm:$0xf]
  %v1829 = vld [vmem:[%s1816 + $0x30] sm:$0xf]
  %v1830 = vld [vmem:[%s1816 + $0x34] sm:$0xf]
  %v1831 = vld [vmem:[%s1816 + $0x38] sm:$0xf]
  %v1832 = vld [vmem:[%s1816 + $0x3c] sm:$0xf]
  %v1833 = vld [vmem:[%s9 + $0xf] sm:$0x1]
  %v1834 = vpack.c.bf16 %v1815, %v1814
  %v1835 = vlaneseq
  %v1836 = vshrl.u32 %v1835, 7
  %v1837 = vsub.s32 0, %v1836
  %v1838 = vrot.slane %v1833, %v1837
  %v1855 = vunpack.c.l.b16 %v1817
  %v1856 = vunpack.c.l.b16 %v1818
  %v1857 = vunpack.c.l.b16 %v1819
  %v1858 = vunpack.c.l.b16 %v1820
  %v1859 = vunpack.c.l.b16 %v1821
  %v1860 = vunpack.c.l.b16 %v1822
  %v1861 = vunpack.c.l.b16 %v1823
  %v1862 = vunpack.c.l.b16 %v1824
  %v1863 = vunpack.c.l.b16 %v1825
  %v1864 = vunpack.c.l.b16 %v1826
  %v1865 = vunpack.c.l.b16 %v1827
  %v1866 = vunpack.c.l.b16 %v1828
  %v1867 = vunpack.c.l.b16 %v1829
  %v1868 = vunpack.c.l.b16 %v1830
  %v1869 = vunpack.c.l.b16 %v1831
  %v1870 = vunpack.c.l.b16 %v1832
  %v1871 = vpack.c.b16 %v1856, %v1855
  %v1872 = vpack.c.b16 %v1858, %v1857
  %v1873 = vpack.c.b16 %v1860, %v1859
  %v1874 = vpack.c.b16 %v1862, %v1861
  %v1875 = vpack.c.b16 %v1864, %v1863
  %v1876 = vpack.c.b16 %v1866, %v1865
  %v1877 = vpack.c.b16 %v1868, %v1867
  %v1878 = vpack.c.b16 %v1870, %v1869
  %1887 = vmatprep.subr.bf16.mxu0 0
  %1888 = vmatpush1.bf16.msra.mxu0 %v1871
  %1889 = vmatprep.subr.bf16.mxu0 0
  %1890 = vmatpush1.bf16.msra.mxu0 %v1872
  %1891 = vmatprep.subr.bf16.mxu0 0
  %1892 = vmatpush1.bf16.msra.mxu0 %v1873
  %1893 = vmatprep.subr.bf16.mxu0 0
  %1894 = vmatpush1.bf16.msra.mxu0 %v1874
  %1895 = vmatprep.subr.bf16.mxu0 0
  %1896 = vmatpush1.bf16.msra.mxu0 %v1875
  %1897 = vmatprep.subr.bf16.mxu0 0
  %1898 = vmatpush1.bf16.msra.mxu0 %v1876
  %1899 = vmatprep.subr.bf16.mxu0 0
  %1900 = vmatpush1.bf16.msra.mxu0 %v1877
  %1901 = vmatprep.subr.bf16.mxu0 0
  %1902 = vmatpush1.bf16.msra.mxu0 %v1878
  %1903 = vmatprep.subr.bf16.mxu0 0
  %1904 = vmatpush1.bf16.msra.mxu0 0
  %1905 = vmatprep.subr.bf16.mxu0 0
  %1906 = vmatpush1.bf16.msra.mxu0 0
  %1907 = vmatprep.subr.bf16.mxu0 0
  %1908 = vmatpush1.bf16.msra.mxu0 0
  %1909 = vmatprep.subr.bf16.mxu0 0
  %1910 = vmatpush1.bf16.msra.mxu0 0
  %1911 = vmatprep.subr.bf16.mxu0 0
  %1912 = vmatpush1.bf16.msra.mxu0 0
  %1913 = vmatprep.subr.bf16.mxu0 0
  %1914 = vmatpush1.bf16.msra.mxu0 0
  %1915 = vmatprep.subr.bf16.mxu0 0
  %1916 = vmatpush1.bf16.msra.mxu0 0
  %1917 = vmatprep.subr.bf16.mxu0 0
  %1918 = vmatpush1.bf16.msra.mxu0 0
  %1919 = vmatprep.mubr.bf16.mxu0 0
  %1920 = vmatmul.mubr.bf16.gmra.mrb[0].mxu0 %v1834
  %v1921 = vpop.f32.mrb[0].mxu0
  %v1922 = vadd.f32 %v1838, %v1921
  %v1923 = vpop.f32.mrb[0].mxu0
  %v1924 = vpop.f32.mrb[0].mxu0
  %v1925 = vadd.f32 %v1838, %v1924
  %v1926 = vpop.f32.mrb[0].mxu0
  %1927 = vdwg.mxu0
  %v1928 = vadd.f32 %v1922, %v1737
  %v1929 = vadd.f32 %v1925, %v1738
  %v1930 = vld [vmem:[%s9 + $0x10] sm:$0x1]
  %v1931 = vld [vmem:[%s9 + $0x11] sm:$0x1]
  %v1932 = vsel %vm133, %v1928, 0.0
  %1933 = vadd.xlane.f32.xlu0 %v1932
  %v1934 = vpop.xlane.xlu0 %1933
  %v1935 = vsel %vm133, %v1929, 0.0
  %1936 = vadd.xlane.f32.xlu0 %v1935
  %v1937 = vpop.xlane.xlu0 %1936
  %v1938 = vmul.f32 %v1934, %v140
  %v1939 = vmul.f32 %v1937, %v140
  %v1940 = vsub.f32 %v1928, %v1938
  %v1941 = vsub.f32 %v1929, %v1939
  %v1942 = vmul.f32 %v1940, %v1940
  %v1943 = vmul.f32 %v1941, %v1941
  %v1944 = vsel %vm133, %v1942, 0.0
  %1945 = vadd.xlane.f32.xlu0 %v1944
  %v1946 = vpop.xlane.xlu0 %1945
  %v1947 = vsel %vm133, %v1943, 0.0
  %1948 = vadd.xlane.f32.xlu0 %v1947
  %v1949 = vpop.xlane.xlu0 %1948
  %v1950 = vmul.f32 %v1946, %v140
  %v1951 = vmul.f32 %v1949, %v140
  %v1952 = vadd.f32 %v1950, 1e-12
  %v1953 = vadd.f32 %v1951, 1e-12
  %v1954 = vrsqrt.pop %v1952
  %v1955 = vrsqrt.pop %v1953
  %v1956 = vmul.f32 %v1940, %v1954
  %v1957 = vmul.f32 %v1941, %v1955
  %v1958 = vlaneseq
  %v1959 = vshrl.u32 %v1958, 7
  %v1960 = vsub.s32 0, %v1959
  %v1961 = vrot.slane %v1930, %v1960
  %v1962 = vmul.f32 %v1956, %v1961
  %v1963 = vmul.f32 %v1957, %v1961
  %v1964 = vlaneseq
  %v1965 = vshrl.u32 %v1964, 7
  %v1966 = vsub.s32 0, %v1965
  %v1967 = vrot.slane %v1931, %v1966
  %v1968 = vadd.f32 %v1962, %v1967
  %v1969 = vadd.f32 %v1963, %v1967
  %v1970 = vld [vmem:[%s8] sm:$0xf]
  %v1971 = vld [vmem:[%s8 + $0x4] sm:$0xf]
  %v1972 = vld [vmem:[%s8 + $0x8] sm:$0xf]
  %v1973 = vld [vmem:[%s8 + $0xc] sm:$0xf]
  %v1974 = vld [vmem:[%s9 + $0x12] sm:$0x1]
  %v1975 = vpack.c.bf16 %v1969, %v1968
  %v1976 = vlaneseq
  %v1977 = vshrl.u32 %v1976, 7
  %v1978 = vsub.s32 0, %v1977
  %v1979 = vrot.slane %v1974, %v1978
  %v1984 = vunpack.c.l.b16 %v1970
  %v1985 = vunpack.c.l.b16 %v1971
  %v1986 = vunpack.c.l.b16 %v1972
  %v1987 = vunpack.c.l.b16 %v1973
  %v1988 = vpack.c.b16 %v1985, %v1984
  %v1989 = vpack.c.b16 %v1987, %v1986
  %v1993 = vsel %vm133, %v1975, 0
  %1995 = vmatprep.subr.bf16.mxu0 0
  %1996 = vmatpush1.bf16.msra.mxu0 %v1988
  %1997 = vmatprep.subr.bf16.mxu0 0
  %1998 = vmatpush1.bf16.msra.mxu0 %v1989
  %1999 = vmatprep.subr.bf16.mxu0 0
  %2000 = vmatpush1.bf16.msra.mxu0 0
  %2001 = vmatprep.subr.bf16.mxu0 0
  %2002 = vmatpush1.bf16.msra.mxu0 0
  %2003 = vmatprep.subr.bf16.mxu0 0
  %2004 = vmatpush1.bf16.msra.mxu0 0
  %2005 = vmatprep.subr.bf16.mxu0 0
  %2006 = vmatpush1.bf16.msra.mxu0 0
  %2007 = vmatprep.subr.bf16.mxu0 0
  %2008 = vmatpush1.bf16.msra.mxu0 0
  %2009 = vmatprep.subr.bf16.mxu0 0
  %2010 = vmatpush1.bf16.msra.mxu0 0
  %2011 = vmatprep.subr.bf16.mxu0 0
  %2012 = vmatpush1.bf16.msra.mxu0 0
  %2013 = vmatprep.subr.bf16.mxu0 0
  %2014 = vmatpush1.bf16.msra.mxu0 0
  %2015 = vmatprep.subr.bf16.mxu0 0
  %2016 = vmatpush1.bf16.msra.mxu0 0
  %2017 = vmatprep.subr.bf16.mxu0 0
  %2018 = vmatpush1.bf16.msra.mxu0 0
  %2019 = vmatprep.subr.bf16.mxu0 0
  %2020 = vmatpush1.bf16.msra.mxu0 0
  %2021 = vmatprep.subr.bf16.mxu0 0
  %2022 = vmatpush1.bf16.msra.mxu0 0
  %2023 = vmatprep.subr.bf16.mxu0 0
  %2024 = vmatpush1.bf16.msra.mxu0 0
  %2025 = vmatprep.subr.bf16.mxu0 0
  %2026 = vmatpush1.bf16.msra.mxu0 0
  %2027 = vmatprep.mubr.bf16.mxu0 0
  %2028 = vmatmul.mubr.bf16.gmra.mrb[0].mxu0 %v1993
  %v2029 = vpop.f32.mrb[0].mxu0
  %v2030 = vadd.f32 %v1979, %v2029
  %v2031 = vpop.f32.mrb[0].mxu0
  %v2032 = vpop.f32.mrb[0].mxu0
  %v2033 = vadd.f32 %v1979, %v2032
  %v2034 = vpop.f32.mrb[0].mxu0
  %2035 = vdwg.mxu0
  %2036 = vmax.xlane.f32.xlu0 %v2030
  %v2037 = vpop.xlane.xlu0 %2036
  %2038 = vmax.xlane.f32.xlu0 %v2033
  %v2039 = vpop.xlane.xlu0 %2038
  %v2040 = vsub.f32 %v2030, %v2037
  %v2041 = vsub.f32 %v2033, %v2039
  %v2042 = vmul.f32 %v2040, 1.442695
  %v2043 = vpow.pop %v2042
  %v2044 = vmul.f32 %v2041, 1.442695
  %v2045 = vpow.pop %v2044
  %2046 = vadd.xlane.f32.xlu0 %v2043
  %v2047 = vpop.xlane.xlu0 %2046
  %2048 = vadd.xlane.f32.xlu0 %v2045
  %v2049 = vpop.xlane.xlu0 %2048
  %v2050 = vlog2.pop %v2047
  %v2051 = vmul.f32 %v2050, 0.6931472
  %v2052 = vlog2.pop %v2049
  %v2053 = vmul.f32 %v2052, 0.6931472
  %v2054 = vsub.f32 %v2040, %v2051
  %v2055 = vsub.f32 %v2041, %v2053
  %2056 = vst [vmem:[%s10] sm:$0xff] %v2054
  %2057 = vst [vmem:[%s10 + $0x8] sm:$0xff] %v2055
  // Predicated region
  $region42: #{forward.1} parent=0 // pred_check
    _
  $region43: #{forward.1} parent=0 // pred_check_branch
    %2059 = sbr.rel (0) target = $region45
  $region44: #{forward.1} parent=0 // pred_region
    _
  $region45: #{forward.1} parent=0 // pred_fallthru
    _
  // Predicated region
  $region46: #{forward.1} parent=0 // pred_check
    _
  $region47: #{forward.1} parent=0 // pred_check_branch
    %2061 = sbr.rel (0) target = $region49
  $region48: #{forward.1} parent=0 // pred_region
    _
  $region49: #{forward.1} parent=0 // pred_fallthru
    _

</llo_original>
